<compile_context>
chip_gen: v7x
topology: tpu7x:2x2x1
jax: 0.10.0
libtpu: 0.0.40
codegen_flags: <defaults>
</compile_context>

<pallas_src>
import functools

import jax
import jax.numpy as jnp
from jax import lax
from jax.experimental import pallas as pl
from jax.experimental.pallas import tpu as pltpu


def _round_up(x, m):
    return ((x + m - 1) // m) * m


def megnet_kernel(a1_ref, a2_ref, bnd_ref, ba2_ref, invc_ref, atoms_ref,
                  w1ea1_ref, w1ea2_ref, w1eb_ref, b1e_ref,
                  w2e_ref, b2e_ref, w3e_ref, b3e_ref,
                  w1vm_ref, w1va_ref, b1v_ref,
                  w2v_ref, b2v_ref, w3v_ref, b3v_ref,
                  atoms_out_ref, bonds_out_ref, agg_ref):
    f32 = jnp.float32
    bf16 = jnp.bfloat16
    pid = pl.program_id(0)

    @pl.when(pid == 0)
    def _init():
        agg_ref[...] = jnp.zeros_like(agg_ref)

    # ---------------- edge update: phi_e on this E-tile (bf16 MXU, f32 acc) ------
    # concat(a1, a2, bonds) @ W1e  ==  a1 @ W1e[:32] + a2 @ W1e[32:64] + bonds @ W1e[64:]
    h = (jnp.dot(a1_ref[...], w1ea1_ref[...], preferred_element_type=f32)
         + jnp.dot(a2_ref[...], w1ea2_ref[...], preferred_element_type=f32)
         + jnp.dot(bnd_ref[...], w1eb_ref[...], preferred_element_type=f32)
         + b1e_ref[...])                                                    # [TE,128]
    h = jnp.maximum(h, 0.0)
    h = jnp.dot(h.astype(bf16), w2e_ref[...], preferred_element_type=f32) + b2e_ref[...]
    h = jnp.maximum(h, 0.0)                                                 # [TE,64]
    bonds_new = (jnp.dot(h.astype(bf16), w3e_ref[...], preferred_element_type=f32)
                 + b3e_ref[...])                                            # [TE,32]
    bonds_out_ref[...] = bonds_new.astype(bonds_out_ref.dtype)

    # -------- node aggregation: per-tile scatter-sum onto bond_atom_2 ------------
    # one-hot is built only for this tile ([N, TE], bf16; exact values 0/1).
    # padded edge rows carry ba2 == N, so their one-hot column is all zeros.
    N = agg_ref.shape[0]
    TE = bonds_new.shape[0]
    node_ids = lax.broadcasted_iota(jnp.int32, (N, TE), 0)                  # [N, TE]
    onehot = (node_ids == ba2_ref[...]).astype(bf16)                        # [N, TE]
    agg_ref[...] += jnp.dot(onehot, bonds_new.astype(bf16),
                            preferred_element_type=f32)                     # [N, 32]

    # ---------------- node update: phi_v on the last tile only -------------------
    @pl.when(pid == pl.num_programs(0) - 1)
    def _finalize():
        mean = agg_ref[...] * invc_ref[...]                                 # scatter_mean
        # concat(mean, atoms) @ W1v  ==  mean @ W1v[:32] + atoms @ W1v[32:]
        hv = (jnp.dot(mean.astype(bf16), w1vm_ref[...], preferred_element_type=f32)
              + jnp.dot(atoms_ref[...], w1va_ref[...], preferred_element_type=f32)
              + b1v_ref[...])                                               # [N,128]
        hv = jnp.maximum(hv, 0.0)
        hv = jnp.dot(hv.astype(bf16), w2v_ref[...], preferred_element_type=f32) + b2v_ref[...]
        hv = jnp.maximum(hv, 0.0)                                           # [N,64]
        av = jnp.dot(hv.astype(bf16), w3v_ref[...], preferred_element_type=f32) + b3v_ref[...]
        atoms_out_ref[...] = av.astype(atoms_out_ref.dtype)                 # [N,32]


def _full_spec(shape):
    nd = len(shape)
    return pl.BlockSpec(shape, lambda i, _nd=nd: (0,) * _nd)


def init_mlp_params(key, in_dim):
    """fff(in_dim): Linear(in,128) -> ReLU -> Linear(128,64) -> ReLU -> Linear(64,32)."""
    dims = [in_dim, 128, 64, 32]
    params = []
    for d_in, d_out in zip(dims[:-1], dims[1:]):
        key, kw, kb = jax.random.split(key, 3)
        scale = 1.0 / jnp.sqrt(jnp.float32(d_in))
        w = jax.random.uniform(kw, (d_in, d_out), jnp.float32, -scale, scale)
        b = jax.random.uniform(kb, (1, d_out), jnp.float32, -scale, scale)
        params += [w, b]
    return params, key


@functools.partial(jax.jit, static_argnames=("te",))
def megnet_layer(bonds, bond_atom_1, bond_atom_2, atoms, params_e, params_v, te=512):
    E, _ = bonds.shape
    N, _ = atoms.shape
    f32, bf16 = jnp.float32, jnp.bfloat16

    # Edge tile size: multiple of 128 lanes (int32 index tile) / 16 sublanes (bf16 rows).
    TE = te if E > te else _round_up(max(E, 1), 128)
    E_pad = _round_up(E, TE)
    num_tiles = E_pad // TE
    pad_e = E_pad - E

    ba1 = bond_atom_1.astype(jnp.int32)
    ba2 = bond_atom_2.astype(jnp.int32)

    # Glue (plain JAX): row-gather of atom features; NO concat (W1e is split instead).
    a1 = jnp.take(atoms, ba1, axis=0)                                        # [E, 32]
    a2 = jnp.take(atoms, ba2, axis=0)                                        # [E, 32]

    a1p = jnp.pad(a1, ((0, pad_e), (0, 0))).astype(bf16)                     # [E_pad, 32]
    a2p = jnp.pad(a2, ((0, pad_e), (0, 0))).astype(bf16)
    bndp = jnp.pad(bonds.astype(f32), ((0, pad_e), (0, 0))).astype(bf16)
    ba2p = jnp.pad(ba2, (0, pad_e), constant_values=N).reshape(1, E_pad)     # pad -> no node

    # Precomputed per-node inverse in-degree (scatter_mean denominator).
    counts = jnp.zeros((N,), f32).at[ba2].add(1.0)
    inv_counts = (1.0 / jnp.maximum(counts, 1.0)).reshape(N, 1)              # [N, 1]

    atoms_bf = atoms.astype(bf16)                                            # [N, 32]

    w1e, b1e, w2e, b2e, w3e, b3e = params_e
    w1v, b1v, w2v, b2v, w3v, b3v = params_v
    w1e_a1 = w1e[:32].astype(bf16)
    w1e_a2 = w1e[32:64].astype(bf16)
    w1e_b = w1e[64:96].astype(bf16)
    w1v_m = w1v[:32].astype(bf16)
    w1v_a = w1v[32:64].astype(bf16)

    inputs = [
        a1p, a2p, bndp, ba2p, inv_counts, atoms_bf,
        w1e_a1, w1e_a2, w1e_b, b1e, w2e.astype(bf16), b2e, w3e.astype(bf16), b3e,
        w1v_m, w1v_a, b1v, w2v.astype(bf16), b2v, w3v.astype(bf16), b3v,
    ]

    tile32 = pl.BlockSpec((TE, 32), lambda i: (i, 0))
    in_specs = [
        tile32, tile32, tile32,                                   # a1, a2, bonds tiles
        pl.BlockSpec((1, TE), lambda i: (0, i)),                  # ba2 tile
        _full_spec((N, 1)),                                       # inv_counts
        _full_spec((N, 32)),                                      # atoms
    ] + [_full_spec(w.shape) for w in inputs[6:]]                 # weights / biases

    out_shape = (
        jax.ShapeDtypeStruct((N, 32), f32),        # atoms_new
        jax.ShapeDtypeStruct((E_pad, 32), f32),    # bonds_new (padded)
    )
    out_specs = (
        pl.BlockSpec((N, 32), lambda i: (0, 0)),                  # resident across E-tiles
        pl.BlockSpec((TE, 32), lambda i: (i, 0)),
    )

    # Cost hint for XLA scheduling around the call.
    flops = (2 * E_pad * (96 * 128 + 128 * 64 + 64 * 32)          # phi_e
             + 2 * N * E_pad * 32                                 # one-hot aggregation
             + 2 * N * (64 * 128 + 128 * 64 + 64 * 32))           # phi_v
    bytes_accessed = (3 * E_pad * 32 * 2 + E_pad * 4 + N * 4 + N * 32 * 2
                      + 2 * (96 * 128 + 128 * 64 + 64 * 32 + 64 * 128)
                      + 4 * (128 + 64 + 32) * 2
                      + N * 32 * 4 + E_pad * 32 * 4)
    cost = pl.CostEstimate(flops=flops, transcendentals=0, bytes_accessed=bytes_accessed)

    # VMEM budget: double-buffered edge tiles + per-tile one-hot temps + accumulators
    # + weights; clamped well below v7x's 64 MiB physical VMEM.
    est = (2 * (3 * TE * 32 * 2 + TE * 4 + TE * 128 * 4 + TE * 32 * 4)
           + 4 * N * TE * 2 + 8 * N * 32 * 4
           + 2 * 1024 * 1024)
    vmem_limit = int(min(max(est, 16 * 1024 * 1024), 48 * 1024 * 1024))

    # TODO(synk): for v7x dual-TensorCore, split phi_e into its own pallas_call with a
    # "parallel" E-axis; here the fused node accumulator forces "arbitrary" ordering.
    atoms_new, bonds_new_pad = pl.pallas_call(
        megnet_kernel,
        grid=(num_tiles,),
        in_specs=in_specs,
        out_specs=out_specs,
        out_shape=out_shape,
        scratch_shapes=[pltpu.VMEM((N, 32), f32)],
        compiler_params=pltpu.CompilerParams(
            dimension_semantics=("arbitrary",),
            vmem_limit_bytes=vmem_limit),
        cost_estimate=cost,
    )(*inputs)

    return atoms_new, bonds_new_pad[:E]


def megnet_reference(bonds, ba1, ba2, atoms, params_e, params_v):
    """Pure-JAX f32 reference mirroring the PyTorch module."""
    w1e, b1e, w2e, b2e, w3e, b3e = params_e
    w1v, b1v, w2v, b2v, w3v, b3v = params_v
    N = atoms.shape[0]
    x = jnp.concatenate([atoms[ba1], atoms[ba2], bonds], axis=1)
    h = jnp.maximum(x @ w1e + b1e, 0.0)
    h = jnp.maximum(h @ w2e + b2e, 0.0)
    bonds_new = h @ w3e + b3e
    agg = jnp.zeros((N, 32), jnp.float32).at[ba2].add(bonds_new)
    cnt = jnp.zeros((N, 1), jnp.float32).at[ba2].add(1.0)
    mean = agg / jnp.maximum(cnt, 1.0)
    xv = jnp.concatenate([mean, atoms], axis=1)
    hv = jnp.maximum(xv @ w1v + b1v, 0.0)
    hv = jnp.maximum(hv @ w2v + b2v, 0.0)
    atoms_new = hv @ w3v + b3v
    return atoms_new, bonds_new


if __name__ == "__main__":
    key = jax.random.PRNGKey(0)

    # Small graph: N atoms with 32 features, E bonds with 32 features.
    N, E = 16, 24
    key, k_atoms, k_bonds, k_i1, k_i2 = jax.random.split(key, 5)
    atoms = jax.random.normal(k_atoms, (N, 32), jnp.float32)
    bonds = jax.random.normal(k_bonds, (E, 32), jnp.float32)
    bond_atom_1 = jax.random.randint(k_i1, (E,), 0, N, jnp.int32)
    bond_atom_2 = jax.random.randint(k_i2, (E,), 0, N, jnp.int32)

    # Deterministic parameter init (phi_e: 96 -> 128 -> 64 -> 32, phi_v: 64 -> ...).
    params_e, key = init_mlp_params(key, 96)
    params_v, key = init_mlp_params(key, 64)

    atoms_new, bonds_new = megnet_layer(
        bonds, bond_atom_1, bond_atom_2, atoms, params_e, params_v)
    jax.block_until_ready((atoms_new, bonds_new))

    assert atoms_new.shape == (N, 32) and bonds_new.shape == (E, 32)

    # Validate against the f32 reference (bf16 MXU operands -> relaxed tolerance).
    atoms_ref, bonds_ref = megnet_reference(
        bonds, bond_atom_1, bond_atom_2, atoms, params_e, params_v)
    assert jnp.allclose(bonds_new, bonds_ref, rtol=1e-1, atol=1e-1), "bonds mismatch"
    assert jnp.allclose(atoms_new, atoms_ref, rtol=1e-1, atol=1e-1), "atoms mismatch"

    print("KERNEL_OK")
</pallas_src>

<mosaic_0001>
module attributes {stable_mosaic.version = 11 : i64} {
  func.func @megnet_kernel(%arg0: i32, %arg1: memref<128x32xbf16, #tpu.memory_space<vmem>>, %arg2: memref<128x32xbf16, #tpu.memory_space<vmem>>, %arg3: memref<128x32xbf16, #tpu.memory_space<vmem>>, %arg4: memref<1x128xi32, #tpu.memory_space<vmem>>, %arg5: memref<16x1xf32, #tpu.memory_space<vmem>>, %arg6: memref<16x32xbf16, #tpu.memory_space<vmem>>, %arg7: memref<32x128xbf16, #tpu.memory_space<vmem>>, %arg8: memref<32x128xbf16, #tpu.memory_space<vmem>>, %arg9: memref<32x128xbf16, #tpu.memory_space<vmem>>, %arg10: memref<1x128xf32, #tpu.memory_space<vmem>>, %arg11: memref<128x64xbf16, #tpu.memory_space<vmem>>, %arg12: memref<1x64xf32, #tpu.memory_space<vmem>>, %arg13: memref<64x32xbf16, #tpu.memory_space<vmem>>, %arg14: memref<1x32xf32, #tpu.memory_space<vmem>>, %arg15: memref<32x128xbf16, #tpu.memory_space<vmem>>, %arg16: memref<32x128xbf16, #tpu.memory_space<vmem>>, %arg17: memref<1x128xf32, #tpu.memory_space<vmem>>, %arg18: memref<128x64xbf16, #tpu.memory_space<vmem>>, %arg19: memref<1x64xf32, #tpu.memory_space<vmem>>, %arg20: memref<64x32xbf16, #tpu.memory_space<vmem>>, %arg21: memref<1x32xf32, #tpu.memory_space<vmem>>, %arg22: memref<16x32xf32, #tpu.memory_space<vmem>>, %arg23: memref<128x32xf32, #tpu.memory_space<vmem>>, %arg24: memref<16x32xf32, #tpu.memory_space<vmem>>) attributes {dimension_semantics = [#tpu.dimension_semantics<arbitrary>], iteration_bounds = array<i64: 1>, scalar_prefetch = 0 : i64, scratch_operands = 1 : i64, tpu.core_type = #tpu.core_type<tc>, window_params = [{transform_indices = @transform_0, window_bounds = array<i64: 128, 32>}, {transform_indices = @transform_1, window_bounds = array<i64: 128, 32>}, {transform_indices = @transform_2, window_bounds = array<i64: 128, 32>}, {transform_indices = @transform_3, window_bounds = array<i64: 1, 128>}, {pipeline_mode = #tpu.pipeline_mode<synchronous>, transform_indices = @transform_4, window_bounds = array<i64: 16, 1>}, {pipeline_mode = #tpu.pipeline_mode<synchronous>, transform_indices = @transform_5, window_bounds = array<i64: 16, 32>}, {pipeline_mode = #tpu.pipeline_mode<synchronous>, transform_indices = @transform_6, window_bounds = array<i64: 32, 128>}, {pipeline_mode = #tpu.pipeline_mode<synchronous>, transform_indices = @transform_7, window_bounds = array<i64: 32, 128>}, {pipeline_mode = #tpu.pipeline_mode<synchronous>, transform_indices = @transform_8, window_bounds = array<i64: 32, 128>}, {pipeline_mode = #tpu.pipeline_mode<synchronous>, transform_indices = @transform_9, window_bounds = array<i64: 1, 128>}, {pipeline_mode = #tpu.pipeline_mode<synchronous>, transform_indices = @transform_10, window_bounds = array<i64: 128, 64>}, {pipeline_mode = #tpu.pipeline_mode<synchronous>, transform_indices = @transform_11, window_bounds = array<i64: 1, 64>}, {pipeline_mode = #tpu.pipeline_mode<synchronous>, transform_indices = @transform_12, window_bounds = array<i64: 64, 32>}, {pipeline_mode = #tpu.pipeline_mode<synchronous>, transform_indices = @transform_13, window_bounds = array<i64: 1, 32>}, {pipeline_mode = #tpu.pipeline_mode<synchronous>, transform_indices = @transform_14, window_bounds = array<i64: 32, 128>}, {pipeline_mode = #tpu.pipeline_mode<synchronous>, transform_indices = @transform_15, window_bounds = array<i64: 32, 128>}, {pipeline_mode = #tpu.pipeline_mode<synchronous>, transform_indices = @transform_16, window_bounds = array<i64: 1, 128>}, {pipeline_mode = #tpu.pipeline_mode<synchronous>, transform_indices = @transform_17, window_bounds = array<i64: 128, 64>}, {pipeline_mode = #tpu.pipeline_mode<synchronous>, transform_indices = @transform_18, window_bounds = array<i64: 1, 64>}, {pipeline_mode = #tpu.pipeline_mode<synchronous>, transform_indices = @transform_19, window_bounds = array<i64: 64, 32>}, {pipeline_mode = #tpu.pipeline_mode<synchronous>, transform_indices = @transform_20, window_bounds = array<i64: 1, 32>}, {pipeline_mode = #tpu.pipeline_mode<synchronous>, transform_indices = @transform_21, window_bounds = array<i64: 16, 32>}, {transform_indices = @transform_22, window_bounds = array<i64: 128, 32>}]} {
    %c0_i32 = arith.constant 0 : i32
    %0 = arith.cmpi eq, %arg0, %c0_i32 : i32
    %1 = arith.extui %0 : i1 to i32
    %c0_i32_0 = arith.constant 0 : i32
    %2 = arith.cmpi ne, %1, %c0_i32_0 : i32
    scf.if %2 {
      %cst_39 = arith.constant 0.000000e+00 : f32
      %49 = vector.broadcast %cst_39 : f32 to vector<16x32xf32>
      %c0_40 = arith.constant 0 : index
      %c0_41 = arith.constant 0 : index
      %50 = vector.load %arg24[%c0_40, %c0_41] : memref<16x32xf32, #tpu.memory_space<vmem>>, vector<16x32xf32>
      tpu.vector_store %arg24[%c0_40, %c0_41], %49 {strides = array<i32>} : memref<16x32xf32, #tpu.memory_space<vmem>>, vector<16x32xf32>,
    } else {
    }
    %c0 = arith.constant 0 : index
    %c0_1 = arith.constant 0 : index
    %3 = vector.load %arg1[%c0, %c0_1] : memref<128x32xbf16, #tpu.memory_space<vmem>>, vector<128x32xbf16>
    %c0_2 = arith.constant 0 : index
    %c0_3 = arith.constant 0 : index
    %4 = vector.load %arg7[%c0_2, %c0_3] : memref<32x128xbf16, #tpu.memory_space<vmem>>, vector<32x128xbf16>
    %cst = arith.constant dense<0.000000e+00> : vector<128x128xf32>
    %5 = tpu.matmul %3, %4, %cst {dimension_numbers = #tpu.dot_dimension_numbers<[1], [0], [0], [1], [0, 0, 1, 1], [], []>} : vector<128x32xbf16>, vector<32x128xbf16>, vector<128x128xf32> -> vector<128x128xf32>
    %c0_4 = arith.constant 0 : index
    %c0_5 = arith.constant 0 : index
    %6 = vector.load %arg2[%c0_4, %c0_5] : memref<128x32xbf16, #tpu.memory_space<vmem>>, vector<128x32xbf16>
    %c0_6 = arith.constant 0 : index
    %c0_7 = arith.constant 0 : index
    %7 = vector.load %arg8[%c0_6, %c0_7] : memref<32x128xbf16, #tpu.memory_space<vmem>>, vector<32x128xbf16>
    %cst_8 = arith.constant dense<0.000000e+00> : vector<128x128xf32>
    %8 = tpu.matmul %6, %7, %cst_8 {dimension_numbers = #tpu.dot_dimension_numbers<[1], [0], [0], [1], [0, 0, 1, 1], [], []>} : vector<128x32xbf16>, vector<32x128xbf16>, vector<128x128xf32> -> vector<128x128xf32>
    %9 = arith.addf %5, %8 : vector<128x128xf32>
    %c0_9 = arith.constant 0 : index
    %c0_10 = arith.constant 0 : index
    %10 = vector.load %arg3[%c0_9, %c0_10] : memref<128x32xbf16, #tpu.memory_space<vmem>>, vector<128x32xbf16>
    %c0_11 = arith.constant 0 : index
    %c0_12 = arith.constant 0 : index
    %11 = vector.load %arg9[%c0_11, %c0_12] : memref<32x128xbf16, #tpu.memory_space<vmem>>, vector<32x128xbf16>
    %cst_13 = arith.constant dense<0.000000e+00> : vector<128x128xf32>
    %12 = tpu.matmul %10, %11, %cst_13 {dimension_numbers = #tpu.dot_dimension_numbers<[1], [0], [0], [1], [0, 0, 1, 1], [], []>} : vector<128x32xbf16>, vector<32x128xbf16>, vector<128x128xf32> -> vector<128x128xf32>
    %13 = arith.addf %9, %12 : vector<128x128xf32>
    %c0_14 = arith.constant 0 : index
    %c0_15 = arith.constant 0 : index
    %14 = vector.load %arg10[%c0_14, %c0_15] : memref<1x128xf32, #tpu.memory_space<vmem>>, vector<1x128xf32>
    %15 = vector.broadcast %14 : vector<1x128xf32> to vector<128x128xf32>
    %16 = arith.addf %13, %15 : vector<128x128xf32>
    %cst_16 = arith.constant 0.000000e+00 : f32
    %17 = vector.broadcast %cst_16 : f32 to vector<128x128xf32>
    %18 = arith.maximumf %16, %17 : vector<128x128xf32>
    %19 = arith.truncf %18 : vector<128x128xf32> to vector<128x128xbf16>
    %c0_17 = arith.constant 0 : index
    %c0_18 = arith.constant 0 : index
    %20 = vector.load %arg11[%c0_17, %c0_18] : memref<128x64xbf16, #tpu.memory_space<vmem>>, vector<128x64xbf16>
    %cst_19 = arith.constant dense<0.000000e+00> : vector<128x64xf32>
    %21 = tpu.matmul %19, %20, %cst_19 {dimension_numbers = #tpu.dot_dimension_numbers<[1], [0], [0], [1], [0, 0, 1, 1], [], []>} : vector<128x128xbf16>, vector<128x64xbf16>, vector<128x64xf32> -> vector<128x64xf32>
    %c0_20 = arith.constant 0 : index
    %c0_21 = arith.constant 0 : index
    %22 = vector.load %arg12[%c0_20, %c0_21] : memref<1x64xf32, #tpu.memory_space<vmem>>, vector<1x64xf32>
    %23 = vector.broadcast %22 : vector<1x64xf32> to vector<128x64xf32>
    %24 = arith.addf %21, %23 : vector<128x64xf32>
    %cst_22 = arith.constant 0.000000e+00 : f32
    %25 = vector.broadcast %cst_22 : f32 to vector<128x64xf32>
    %26 = arith.maximumf %24, %25 : vector<128x64xf32>
    %27 = arith.truncf %26 : vector<128x64xf32> to vector<128x64xbf16>
    %c0_23 = arith.constant 0 : index
    %c0_24 = arith.constant 0 : index
    %28 = vector.load %arg13[%c0_23, %c0_24] : memref<64x32xbf16, #tpu.memory_space<vmem>>, vector<64x32xbf16>
    %cst_25 = arith.constant dense<0.000000e+00> : vector<128x32xf32>
    %29 = tpu.matmul %27, %28, %cst_25 {dimension_numbers = #tpu.dot_dimension_numbers<[1], [0], [0], [1], [0, 0, 1, 1], [], []>} : vector<128x64xbf16>, vector<64x32xbf16>, vector<128x32xf32> -> vector<128x32xf32>
    %c0_26 = arith.constant 0 : index
    %c0_27 = arith.constant 0 : index
    %30 = vector.load %arg14[%c0_26, %c0_27] : memref<1x32xf32, #tpu.memory_space<vmem>>, vector<1x32xf32>
    %31 = vector.broadcast %30 : vector<1x32xf32> to vector<128x32xf32>
    %32 = arith.addf %29, %31 : vector<128x32xf32>
    %c0_28 = arith.constant 0 : index
    %c0_29 = arith.constant 0 : index
    %33 = vector.load %arg23[%c0_28, %c0_29] : memref<128x32xf32, #tpu.memory_space<vmem>>, vector<128x32xf32>
    tpu.vector_store %arg23[%c0_28, %c0_29], %32 {strides = array<i32>} : memref<128x32xf32, #tpu.memory_space<vmem>>, vector<128x32xf32>,
    %34 = tpu.iota {dimensions = array<i32: 0>} : vector<16x128xi32>
    %c0_30 = arith.constant 0 : index
    %c0_31 = arith.constant 0 : index
    %35 = vector.load %arg4[%c0_30, %c0_31] : memref<1x128xi32, #tpu.memory_space<vmem>>, vector<1x128xi32>
    %36 = vector.broadcast %35 : vector<1x128xi32> to vector<16x128xi32>
    %37 = arith.cmpi eq, %34, %36 : vector<16x128xi32>
    %38 = arith.extui %37 : vector<16x128xi1> to vector<16x128xi32>
    %39 = arith.sitofp %38 : vector<16x128xi32> to vector<16x128xf32>
    %40 = arith.truncf %39 : vector<16x128xf32> to vector<16x128xbf16>
    %c0_32 = arith.constant 0 : index
    %c0_33 = arith.constant 0 : index
    %41 = vector.load %arg24[%c0_32, %c0_33] : memref<16x32xf32, #tpu.memory_space<vmem>>, vector<16x32xf32>
    %42 = arith.truncf %32 : vector<128x32xf32> to vector<128x32xbf16>
    %cst_34 = arith.constant dense<0.000000e+00> : vector<16x32xf32>
    %43 = tpu.matmul %40, %42, %cst_34 {dimension_numbers = #tpu.dot_dimension_numbers<[1], [0], [0], [1], [0, 0, 1, 1], [], []>} : vector<16x128xbf16>, vector<128x32xbf16>, vector<16x32xf32> -> vector<16x32xf32>
    %44 = arith.addf %41, %43 : vector<16x32xf32>
    %c0_35 = arith.constant 0 : index
    %c0_36 = arith.constant 0 : index
    %45 = vector.load %arg24[%c0_35, %c0_36] : memref<16x32xf32, #tpu.memory_space<vmem>>, vector<16x32xf32>
    tpu.vector_store %arg24[%c0_35, %c0_36], %44 {strides = array<i32>} : memref<16x32xf32, #tpu.memory_space<vmem>>, vector<16x32xf32>,
    %c0_i32_37 = arith.constant 0 : i32
    %46 = arith.cmpi eq, %arg0, %c0_i32_37 : i32
    %47 = arith.extui %46 : i1 to i32
    %c0_i32_38 = arith.constant 0 : i32
    %48 = arith.cmpi ne, %47, %c0_i32_38 : i32
    scf.if %48 {
      %c0_39 = arith.constant 0 : index
      %c0_40 = arith.constant 0 : index
      %49 = vector.load %arg24[%c0_39, %c0_40] : memref<16x32xf32, #tpu.memory_space<vmem>>, vector<16x32xf32>
      %c0_41 = arith.constant 0 : index
      %c0_42 = arith.constant 0 : index
      %50 = vector.load %arg5[%c0_41, %c0_42] : memref<16x1xf32, #tpu.memory_space<vmem>>, vector<16x1xf32>
      %51 = vector.broadcast %50 : vector<16x1xf32> to vector<16x32xf32>
      %52 = arith.mulf %49, %51 : vector<16x32xf32>
      %53 = arith.truncf %52 : vector<16x32xf32> to vector<16x32xbf16>
      %c0_43 = arith.constant 0 : index
      %c0_44 = arith.constant 0 : index
      %54 = vector.load %arg15[%c0_43, %c0_44] : memref<32x128xbf16, #tpu.memory_space<vmem>>, vector<32x128xbf16>
      %cst_45 = arith.constant dense<0.000000e+00> : vector<16x128xf32>
      %55 = tpu.matmul %53, %54, %cst_45 {dimension_numbers = #tpu.dot_dimension_numbers<[1], [0], [0], [1], [0, 0, 1, 1], [], []>} : vector<16x32xbf16>, vector<32x128xbf16>, vector<16x128xf32> -> vector<16x128xf32>
      %c0_46 = arith.constant 0 : index
      %c0_47 = arith.constant 0 : index
      %56 = vector.load %arg6[%c0_46, %c0_47] : memref<16x32xbf16, #tpu.memory_space<vmem>>, vector<16x32xbf16>
      %c0_48 = arith.constant 0 : index
      %c0_49 = arith.constant 0 : index
      %57 = vector.load %arg16[%c0_48, %c0_49] : memref<32x128xbf16, #tpu.memory_space<vmem>>, vector<32x128xbf16>
      %cst_50 = arith.constant dense<0.000000e+00> : vector<16x128xf32>
      %58 = tpu.matmul %56, %57, %cst_50 {dimension_numbers = #tpu.dot_dimension_numbers<[1], [0], [0], [1], [0, 0, 1, 1], [], []>} : vector<16x32xbf16>, vector<32x128xbf16>, vector<16x128xf32> -> vector<16x128xf32>
      %59 = arith.addf %55, %58 : vector<16x128xf32>
      %c0_51 = arith.constant 0 : index
      %c0_52 = arith.constant 0 : index
      %60 = vector.load %arg17[%c0_51, %c0_52] : memref<1x128xf32, #tpu.memory_space<vmem>>, vector<1x128xf32>
      %61 = vector.broadcast %60 : vector<1x128xf32> to vector<16x128xf32>
      %62 = arith.addf %59, %61 : vector<16x128xf32>
      %cst_53 = arith.constant 0.000000e+00 : f32
      %63 = vector.broadcast %cst_53 : f32 to vector<16x128xf32>
      %64 = arith.maximumf %62, %63 : vector<16x128xf32>
      %65 = arith.truncf %64 : vector<16x128xf32> to vector<16x128xbf16>
      %c0_54 = arith.constant 0 : index
      %c0_55 = arith.constant 0 : index
      %66 = vector.load %arg18[%c0_54, %c0_55] : memref<128x64xbf16, #tpu.memory_space<vmem>>, vector<128x64xbf16>
      %cst_56 = arith.constant dense<0.000000e+00> : vector<16x64xf32>
      %67 = tpu.matmul %65, %66, %cst_56 {dimension_numbers = #tpu.dot_dimension_numbers<[1], [0], [0], [1], [0, 0, 1, 1], [], []>} : vector<16x128xbf16>, vector<128x64xbf16>, vector<16x64xf32> -> vector<16x64xf32>
      %c0_57 = arith.constant 0 : index
      %c0_58 = arith.constant 0 : index
      %68 = vector.load %arg19[%c0_57, %c0_58] : memref<1x64xf32, #tpu.memory_space<vmem>>, vector<1x64xf32>
      %69 = vector.broadcast %68 : vector<1x64xf32> to vector<16x64xf32>
      %70 = arith.addf %67, %69 : vector<16x64xf32>
      %cst_59 = arith.constant 0.000000e+00 : f32
      %71 = vector.broadcast %cst_59 : f32 to vector<16x64xf32>
      %72 = arith.maximumf %70, %71 : vector<16x64xf32>
      %73 = arith.truncf %72 : vector<16x64xf32> to vector<16x64xbf16>
      %c0_60 = arith.constant 0 : index
      %c0_61 = arith.constant 0 : index
      %74 = vector.load %arg20[%c0_60, %c0_61] : memref<64x32xbf16, #tpu.memory_space<vmem>>, vector<64x32xbf16>
      %cst_62 = arith.constant dense<0.000000e+00> : vector<16x32xf32>
      %75 = tpu.matmul %73, %74, %cst_62 {dimension_numbers = #tpu.dot_dimension_numbers<[1], [0], [0], [1], [0, 0, 1, 1], [], []>} : vector<16x64xbf16>, vector<64x32xbf16>, vector<16x32xf32> -> vector<16x32xf32>
      %c0_63 = arith.constant 0 : index
      %c0_64 = arith.constant 0 : index
      %76 = vector.load %arg21[%c0_63, %c0_64] : memref<1x32xf32, #tpu.memory_space<vmem>>, vector<1x32xf32>
      %77 = vector.broadcast %76 : vector<1x32xf32> to vector<16x32xf32>
      %78 = arith.addf %75, %77 : vector<16x32xf32>
      %c0_65 = arith.constant 0 : index
      %c0_66 = arith.constant 0 : index
      %79 = vector.load %arg22[%c0_65, %c0_66] : memref<16x32xf32, #tpu.memory_space<vmem>>, vector<16x32xf32>
      tpu.vector_store %arg22[%c0_65, %c0_66], %78 {strides = array<i32>} : memref<16x32xf32, #tpu.memory_space<vmem>>, vector<16x32xf32>,
    } else {
    }
    return
  }
  func.func @transform_0(%arg0: i32) -> (i32, i32) {
    %c0_i32 = arith.constant 0 : i32
    %c0_i32_0 = arith.constant 0 : i32
    return %arg0, %c0_i32 : i32, i32
  }
  func.func @transform_1(%arg0: i32) -> (i32, i32) {
    %c0_i32 = arith.constant 0 : i32
    %c0_i32_0 = arith.constant 0 : i32
    return %arg0, %c0_i32 : i32, i32
  }
  func.func @transform_2(%arg0: i32) -> (i32, i32) {
    %c0_i32 = arith.constant 0 : i32
    %c0_i32_0 = arith.constant 0 : i32
    return %arg0, %c0_i32 : i32, i32
  }
  func.func @transform_3(%arg0: i32) -> (i32, i32) {
    %c0_i32 = arith.constant 0 : i32
    %c0_i32_0 = arith.constant 0 : i32
    return %c0_i32, %arg0 : i32, i32
  }
  func.func @transform_4(%arg0: i32) -> (i32, i32) {
    %c0_i32 = arith.constant 0 : i32
    %c0_i32_0 = arith.constant 0 : i32
    %c0_i32_1 = arith.constant 0 : i32
    return %c0_i32, %c0_i32_0 : i32, i32
  }
  func.func @transform_5(%arg0: i32) -> (i32, i32) {
    %c0_i32 = arith.constant 0 : i32
    %c0_i32_0 = arith.constant 0 : i32
    %c0_i32_1 = arith.constant 0 : i32
    return %c0_i32, %c0_i32_0 : i32, i32
  }
  func.func @transform_6(%arg0: i32) -> (i32, i32) {
    %c0_i32 = arith.constant 0 : i32
    %c0_i32_0 = arith.constant 0 : i32
    %c0_i32_1 = arith.constant 0 : i32
    return %c0_i32, %c0_i32_0 : i32, i32
  }
  func.func @transform_7(%arg0: i32) -> (i32, i32) {
    %c0_i32 = arith.constant 0 : i32
    %c0_i32_0 = arith.constant 0 : i32
    %c0_i32_1 = arith.constant 0 : i32
    return %c0_i32, %c0_i32_0 : i32, i32
  }
  func.func @transform_8(%arg0: i32) -> (i32, i32) {
    %c0_i32 = arith.constant 0 : i32
    %c0_i32_0 = arith.constant 0 : i32
    %c0_i32_1 = arith.constant 0 : i32
    return %c0_i32, %c0_i32_0 : i32, i32
  }
  func.func @transform_9(%arg0: i32) -> (i32, i32) {
    %c0_i32 = arith.constant 0 : i32
    %c0_i32_0 = arith.constant 0 : i32
    %c0_i32_1 = arith.constant 0 : i32
    return %c0_i32, %c0_i32_0 : i32, i32
  }
  func.func @transform_10(%arg0: i32) -> (i32, i32) {
    %c0_i32 = arith.constant 0 : i32
    %c0_i32_0 = arith.constant 0 : i32
    %c0_i32_1 = arith.constant 0 : i32
    return %c0_i32, %c0_i32_0 : i32, i32
  }
  func.func @transform_11(%arg0: i32) -> (i32, i32) {
    %c0_i32 = arith.constant 0 : i32
    %c0_i32_0 = arith.constant 0 : i32
    %c0_i32_1 = arith.constant 0 : i32
    return %c0_i32, %c0_i32_0 : i32, i32
  }
  func.func @transform_12(%arg0: i32) -> (i32, i32) {
    %c0_i32 = arith.constant 0 : i32
    %c0_i32_0 = arith.constant 0 : i32
    %c0_i32_1 = arith.constant 0 : i32
    return %c0_i32, %c0_i32_0 : i32, i32
  }
  func.func @transform_13(%arg0: i32) -> (i32, i32) {
    %c0_i32 = arith.constant 0 : i32
    %c0_i32_0 = arith.constant 0 : i32
    %c0_i32_1 = arith.constant 0 : i32
    return %c0_i32, %c0_i32_0 : i32, i32
  }
  func.func @transform_14(%arg0: i32) -> (i32, i32) {
    %c0_i32 = arith.constant 0 : i32
    %c0_i32_0 = arith.constant 0 : i32
    %c0_i32_1 = arith.constant 0 : i32
    return %c0_i32, %c0_i32_0 : i32, i32
  }
  func.func @transform_15(%arg0: i32) -> (i32, i32) {
    %c0_i32 = arith.constant 0 : i32
    %c0_i32_0 = arith.constant 0 : i32
    %c0_i32_1 = arith.constant 0 : i32
    return %c0_i32, %c0_i32_0 : i32, i32
  }
  func.func @transform_16(%arg0: i32) -> (i32, i32) {
    %c0_i32 = arith.constant 0 : i32
    %c0_i32_0 = arith.constant 0 : i32
    %c0_i32_1 = arith.constant 0 : i32
    return %c0_i32, %c0_i32_0 : i32, i32
  }
  func.func @transform_17(%arg0: i32) -> (i32, i32) {
    %c0_i32 = arith.constant 0 : i32
    %c0_i32_0 = arith.constant 0 : i32
    %c0_i32_1 = arith.constant 0 : i32
    return %c0_i32, %c0_i32_0 : i32, i32
  }
  func.func @transform_18(%arg0: i32) -> (i32, i32) {
    %c0_i32 = arith.constant 0 : i32
    %c0_i32_0 = arith.constant 0 : i32
    %c0_i32_1 = arith.constant 0 : i32
    return %c0_i32, %c0_i32_0 : i32, i32
  }
  func.func @transform_19(%arg0: i32) -> (i32, i32) {
    %c0_i32 = arith.constant 0 : i32
    %c0_i32_0 = arith.constant 0 : i32
    %c0_i32_1 = arith.constant 0 : i32
    return %c0_i32, %c0_i32_0 : i32, i32
  }
  func.func @transform_20(%arg0: i32) -> (i32, i32) {
    %c0_i32 = arith.constant 0 : i32
    %c0_i32_0 = arith.constant 0 : i32
    %c0_i32_1 = arith.constant 0 : i32
    return %c0_i32, %c0_i32_0 : i32, i32
  }
  func.func @transform_21(%arg0: i32) -> (i32, i32) {
    %c0_i32 = arith.constant 0 : i32
    %c0_i32_0 = arith.constant 0 : i32
    %c0_i32_1 = arith.constant 0 : i32
    return %c0_i32, %c0_i32_0 : i32, i32
  }
  func.func @transform_22(%arg0: i32) -> (i32, i32) {
    %c0_i32 = arith.constant 0 : i32
    %c0_i32_0 = arith.constant 0 : i32
    return %arg0, %c0_i32 : i32, i32
  }
}

</mosaic_0001>

<llo_original>
// kernel: megnet_layer.1
$region0: #{megnet_layer.1}
  #allocation0 [shape = 'u32[]', space=smem, size = 0x4, offset = 0x4, fixed_abs, tag = 'smem constant byte address 0x4 - core index']
  #allocation1 [shape = 'u32[144,128]{1,0:T(1,128)}', space=vmem, size = 0x12000, scoped, tag = 'internal scratch']
  #allocation2 [shape = 'f32[16,32]{1,0:T(8,128)}', space=vmem, size = 0x2000, scoped, tag = 'scratch operand']
  %s0 = inlined_call_operand.vmem [shape: bf16[128,32], index: 0, kind: input, shape index: {}]
  %s1 = inlined_call_operand.vmem [shape: bf16[128,32], index: 1, kind: input, shape index: {}]
  %s2 = inlined_call_operand.vmem [shape: bf16[128,32], index: 2, kind: input, shape index: {}]
  %s3 = inlined_call_operand.vmem [shape: s32[1,128], index: 3, kind: input, shape index: {}]
  %s4 = inlined_call_operand.vmem [shape: f32[16,1], index: 4, kind: input, shape index: {}]
  %s5 = inlined_call_operand.vmem [shape: bf16[16,32], index: 5, kind: input, shape index: {}]
  %s6 = inlined_call_operand.vmem [shape: bf16[32,128], index: 6, kind: input, shape index: {}]
  %s7 = inlined_call_operand.vmem [shape: bf16[32,128], index: 7, kind: input, shape index: {}]
  %s8 = inlined_call_operand.vmem [shape: bf16[32,128], index: 8, kind: input, shape index: {}]
  %s9 = inlined_call_operand.vmem [shape: f32[1,128], index: 9, kind: input, shape index: {}]
  %s10 = inlined_call_operand.vmem [shape: bf16[128,64], index: 10, kind: input, shape index: {}]
  %s11 = inlined_call_operand.vmem [shape: f32[1,64], index: 11, kind: input, shape index: {}]
  %s12 = inlined_call_operand.vmem [shape: bf16[64,32], index: 12, kind: input, shape index: {}]
  %s13 = inlined_call_operand.vmem [shape: f32[1,32], index: 13, kind: input, shape index: {}]
  %s14 = inlined_call_operand.vmem [shape: bf16[32,128], index: 14, kind: input, shape index: {}]
  %s15 = inlined_call_operand.vmem [shape: bf16[32,128], index: 15, kind: input, shape index: {}]
  %s16 = inlined_call_operand.vmem [shape: f32[1,128], index: 16, kind: input, shape index: {}]
  %s17 = inlined_call_operand.vmem [shape: bf16[128,64], index: 17, kind: input, shape index: {}]
  %s18 = inlined_call_operand.vmem [shape: f32[1,64], index: 18, kind: input, shape index: {}]
  %s19 = inlined_call_operand.vmem [shape: bf16[64,32], index: 19, kind: input, shape index: {}]
  %s20 = inlined_call_operand.vmem [shape: f32[1,32], index: 20, kind: input, shape index: {}]
  %s21 = inlined_call_operand.hbm [shape: f32[16,32], index: 21, kind: output, shape index: {0}]
  %s22 = inlined_call_operand.vmem [shape: f32[128,32], index: 22, kind: output, shape index: {1}]
  %23 = xla_tuple %s21, %s22
  %s24 = sld [smem:[#allocation0]]
  $region110: #{megnet_layer.1} parent=0
    _
  %s26 = ssub.s32 1, %s24
  %s27 = scalar_select 0, %s26, %s24
  $region1: #{megnet_layer.1} parent=0
    #allocation3 [shape = 'u8[8192]{0}', space=vmem, size = 0x2000, scoped, tag = 'output window, operand 0, single buffered']
    #allocation4 [shape = 's32[1]{0}', space=sflag, size = 0x4, scoped, tag = 'scoped memory for megnet_layer.1']
    %28 = vsyncpa [#allocation4], 0
    // Predicated region
    $region2: #{megnet_layer.1} parent=1 // pred_check
      _
    $region3: #{megnet_layer.1} parent=1 // pred_check_branch
      %30 = sbr.rel (0) target = $region5
    $region4: #{megnet_layer.1} parent=1 // pred_region
      _
    $region5: #{megnet_layer.1} parent=1 // pred_fallthru
      _
    // Predicated region
    $region6: #{megnet_layer.1} parent=1 // pred_check
      _
    $region7: #{megnet_layer.1} parent=1 // pred_check_branch
      %32 = sbr.rel (0) target = $region9
    $region8: #{megnet_layer.1} parent=1 // pred_region
      _
    $region9: #{megnet_layer.1} parent=1 // pred_fallthru
      _
    // Predicated region
    $region10: #{megnet_layer.1} parent=1 // pred_check
      _
    $region11: #{megnet_layer.1} parent=1 // pred_check_branch
      %34 = sbr.rel (0) target = $region13
    $region12: #{megnet_layer.1} parent=1 // pred_region
      _
    $region13: #{megnet_layer.1} parent=1 // pred_fallthru
      _
    // Predicated region
    $region14: #{megnet_layer.1} parent=1 // pred_check
      _
    $region15: #{megnet_layer.1} parent=1 // pred_check_branch
      %36 = sbr.rel (0) target = $region17
    $region16: #{megnet_layer.1} parent=1 // pred_region
      _
    $region17: #{megnet_layer.1} parent=1 // pred_fallthru
      _
    // Predicated region
    $region18: #{megnet_layer.1} parent=1 // pred_check
      _
    $region19: #{megnet_layer.1} parent=1 // pred_check_branch
      %38 = sbr.rel (0) target = $region21
    $region20: #{megnet_layer.1} parent=1 // pred_region
      _
    $region21: #{megnet_layer.1} parent=1 // pred_fallthru
      _
    // Predicated region
    $region22: #{megnet_layer.1} parent=1 // pred_check
      _
    $region23: #{megnet_layer.1} parent=1 // pred_check_branch
      %40 = sbr.rel (0) target = $region25
    $region24: #{megnet_layer.1} parent=1 // pred_region
      _
    $region25: #{megnet_layer.1} parent=1 // pred_fallthru
      _
    // Predicated region
    $region26: #{megnet_layer.1} parent=1 // pred_check
      _
    $region27: #{megnet_layer.1} parent=1 // pred_check_branch
      %42 = sbr.rel (0) target = $region29
    $region28: #{megnet_layer.1} parent=1 // pred_region
      _
    $region29: #{megnet_layer.1} parent=1 // pred_fallthru
      _
    // Predicated region
    $region30: #{megnet_layer.1} parent=1 // pred_check
      _
    $region31: #{megnet_layer.1} parent=1 // pred_check_branch
      %44 = sbr.rel (0) target = $region33
    $region32: #{megnet_layer.1} parent=1 // pred_region
      _
    $region33: #{megnet_layer.1} parent=1 // pred_fallthru
      _
    // Predicated region
    $region34: #{megnet_layer.1} parent=1 // pred_check
      _
    $region35: #{megnet_layer.1} parent=1 // pred_check_branch
      %46 = sbr.rel (0) target = $region37
    $region36: #{megnet_layer.1} parent=1 // pred_region
      _
    $region37: #{megnet_layer.1} parent=1 // pred_fallthru
      _
    // Predicated region
    $region38: #{megnet_layer.1} parent=1 // pred_check
      _
    $region39: #{megnet_layer.1} parent=1 // pred_check_branch
      %48 = sbr.rel (0) target = $region41
    $region40: #{megnet_layer.1} parent=1 // pred_region
      _
    $region41: #{megnet_layer.1} parent=1 // pred_fallthru
      _
    // Predicated region
    $region42: #{megnet_layer.1} parent=1 // pred_check
      _
    $region43: #{megnet_layer.1} parent=1 // pred_check_branch
      %50 = sbr.rel (0) target = $region45
    $region44: #{megnet_layer.1} parent=1 // pred_region
      _
    $region45: #{megnet_layer.1} parent=1 // pred_fallthru
      _
    // Predicated region
    $region46: #{megnet_layer.1} parent=1 // pred_check
      _
    $region47: #{megnet_layer.1} parent=1 // pred_check_branch
      %52 = sbr.rel (0) target = $region49
    $region48: #{megnet_layer.1} parent=1 // pred_region
      _
    $region49: #{megnet_layer.1} parent=1 // pred_fallthru
      _
    // Predicated region
    $region50: #{megnet_layer.1} parent=1 // pred_check
      _
    $region51: #{megnet_layer.1} parent=1 // pred_check_branch
      %54 = sbr.rel (0) target = $region53
    $region52: #{megnet_layer.1} parent=1 // pred_region
      _
    $region53: #{megnet_layer.1} parent=1 // pred_fallthru
      _
    // Predicated region
    $region54: #{megnet_layer.1} parent=1 // pred_check
      _
    $region55: #{megnet_layer.1} parent=1 // pred_check_branch
      %56 = sbr.rel (0) target = $region57
    $region56: #{megnet_layer.1} parent=1 // pred_region
      _
    $region57: #{megnet_layer.1} parent=1 // pred_fallthru
      _
    // Predicated region
    $region58: #{megnet_layer.1} parent=1 // pred_check
      _
    $region59: #{megnet_layer.1} parent=1 // pred_check_branch
      %58 = sbr.rel (0) target = $region61
    $region60: #{megnet_layer.1} parent=1 // pred_region
      _
    $region61: #{megnet_layer.1} parent=1 // pred_fallthru
      _
    // Predicated region
    $region62: #{megnet_layer.1} parent=1 // pred_check
      _
    $region63: #{megnet_layer.1} parent=1 // pred_check_branch
      %60 = sbr.rel (0) target = $region65
    $region64: #{megnet_layer.1} parent=1 // pred_region
      _
    $region65: #{megnet_layer.1} parent=1 // pred_fallthru
      _
    // Predicated region
    $region66: #{megnet_layer.1} parent=1 // pred_check
      _
    $region67: #{megnet_layer.1} parent=1 // pred_check_branch
      %62 = sbr.rel (0) target = $region69
    $region68: #{megnet_layer.1} parent=1 // pred_region
      _
    $region69: #{megnet_layer.1} parent=1 // pred_fallthru
      _
    // Predicated region
    $region70: #{megnet_layer.1} parent=1 // pred_check
      _
    $region71: #{megnet_layer.1} parent=1 // pred_check_branch
      %64 = sbr.rel (0) target = $region73
    $region72: #{megnet_layer.1} parent=1 // pred_region
      _
    $region73: #{megnet_layer.1} parent=1 // pred_fallthru
      _
    // Predicated region
    $region74: #{megnet_layer.1} parent=1 // pred_check
      _
    $region75: #{megnet_layer.1} parent=1 // pred_check_branch
      %66 = sbr.rel (0) target = $region77
    $region76: #{megnet_layer.1} parent=1 // pred_region
      _
    $region77: #{megnet_layer.1} parent=1 // pred_fallthru
      _
    // Predicated region
    $region78: #{megnet_layer.1} parent=1 // pred_check
      _
    $region79: #{megnet_layer.1} parent=1 // pred_check_branch
      %68 = sbr.rel (0) target = $region81
    $region80: #{megnet_layer.1} parent=1 // pred_region
      _
    $region81: #{megnet_layer.1} parent=1 // pred_fallthru
      _
    // Predicated region
    $region82: #{megnet_layer.1} parent=1 // pred_check
      _
    $region83: #{megnet_layer.1} parent=1 // pred_check_branch
      %70 = sbr.rel (0) target = $region85
    $region84: #{megnet_layer.1} parent=1 // pred_region
      _
    $region85: #{megnet_layer.1} parent=1 // pred_fallthru
      _
    %p72 = scmp.eq.s32.totalorder 0, 0
    // Predicated region
    $region86: #{megnet_layer.1} parent=1 // pred_check
      %p73 = pneg %p72
    $region87: #{megnet_layer.1} parent=1 // pred_check_branch
      %75 = sbr.rel (%p73) target = $region89
    $region88: #{megnet_layer.1} parent=1 // pred_region
      %vm76 = vcmask 261120
      %77 = vst.msk [vmem:[#allocation2] sm:$0xff] %vm76, 0.0
      %78 = vst.msk [vmem:[#allocation2 + $0x8] sm:$0xff] %vm76, 0.0
    $region89: #{megnet_layer.1} parent=1 // pred_fallthru
      _
    %v79 = vld [vmem:[%s0] sm:$0xf]
    %v80 = vld [vmem:[%s0 + $0x4] sm:$0xf]
    %v81 = vld [vmem:[%s0 + $0x8] sm:$0xf]
    %v82 = vld [vmem:[%s0 + $0xc] sm:$0xf]
    %v83 = vld [vmem:[%s0 + $0x10] sm:$0xf]
    %v84 = vld [vmem:[%s0 + $0x14] sm:$0xf]
    %v85 = vld [vmem:[%s0 + $0x18] sm:$0xf]
    %v86 = vld [vmem:[%s0 + $0x1c] sm:$0xf]
    %v87 = vld [vmem:[%s0 + $0x20] sm:$0xf]
    %v88 = vld [vmem:[%s0 + $0x24] sm:$0xf]
    %v89 = vld [vmem:[%s0 + $0x28] sm:$0xf]
    %v90 = vld [vmem:[%s0 + $0x2c] sm:$0xf]
    %v91 = vld [vmem:[%s0 + $0x30] sm:$0xf]
    %v92 = vld [vmem:[%s0 + $0x34] sm:$0xf]
    %v93 = vld [vmem:[%s0 + $0x38] sm:$0xf]
    %v94 = vld [vmem:[%s0 + $0x3c] sm:$0xf]
    %v95 = vld [vmem:[%s6] sm:$0xf]
    %v96 = vld [vmem:[%s6 + $0x4] sm:$0xf]
    %v97 = vld [vmem:[%s6 + $0x8] sm:$0xf]
    %v98 = vld [vmem:[%s6 + $0xc] sm:$0xf]
    %v99 = vld [vmem:[%s1] sm:$0xf]
    %v100 = vld [vmem:[%s1 + $0x4] sm:$0xf]
    %v101 = vld [vmem:[%s1 + $0x8] sm:$0xf]
    %v102 = vld [vmem:[%s1 + $0xc] sm:$0xf]
    %v103 = vld [vmem:[%s1 + $0x10] sm:$0xf]
    %v104 = vld [vmem:[%s1 + $0x14] sm:$0xf]
    %v105 = vld [vmem:[%s1 + $0x18] sm:$0xf]
    %v106 = vld [vmem:[%s1 + $0x1c] sm:$0xf]
    %v107 = vld [vmem:[%s1 + $0x20] sm:$0xf]
    %v108 = vld [vmem:[%s1 + $0x24] sm:$0xf]
    %v109 = vld [vmem:[%s1 + $0x28] sm:$0xf]
    %v110 = vld [vmem:[%s1 + $0x2c] sm:$0xf]
    %v111 = vld [vmem:[%s1 + $0x30] sm:$0xf]
    %v112 = vld [vmem:[%s1 + $0x34] sm:$0xf]
    %v113 = vld [vmem:[%s1 + $0x38] sm:$0xf]
    %v114 = vld [vmem:[%s1 + $0x3c] sm:$0xf]
    %v115 = vld [vmem:[%s7] sm:$0xf]
    %v116 = vld [vmem:[%s7 + $0x4] sm:$0xf]
    %v117 = vld [vmem:[%s7 + $0x8] sm:$0xf]
    %v118 = vld [vmem:[%s7 + $0xc] sm:$0xf]
    %v135 = vunpack.c.l.b16 %v99
    %v136 = vunpack.c.l.b16 %v100
    %v137 = vunpack.c.l.b16 %v101
    %v138 = vunpack.c.l.b16 %v102
    %v139 = vunpack.c.l.b16 %v103
    %v140 = vunpack.c.l.b16 %v104
    %v141 = vunpack.c.l.b16 %v105
    %v142 = vunpack.c.l.b16 %v106
    %v143 = vunpack.c.l.b16 %v107
    %v144 = vunpack.c.l.b16 %v108
    %v145 = vunpack.c.l.b16 %v109
    %v146 = vunpack.c.l.b16 %v110
    %v147 = vunpack.c.l.b16 %v111
    %v148 = vunpack.c.l.b16 %v112
    %v149 = vunpack.c.l.b16 %v113
    %v150 = vunpack.c.l.b16 %v114
    %v151 = vpack.c.b16 %v136, %v135
    %v152 = vpack.c.b16 %v138, %v137
    %v153 = vpack.c.b16 %v140, %v139
    %v154 = vpack.c.b16 %v142, %v141
    %v155 = vpack.c.b16 %v144, %v143
    %v156 = vpack.c.b16 %v146, %v145
    %v157 = vpack.c.b16 %v148, %v147
    %v158 = vpack.c.b16 %v150, %v149
    %v163 = vunpack.c.l.b16 %v115
    %v164 = vunpack.c.l.b16 %v116
    %v165 = vunpack.c.l.b16 %v117
    %v166 = vunpack.c.l.b16 %v118
    %v167 = vpack.c.b16 %v164, %v163
    %v168 = vpack.c.b16 %v166, %v165
    %vm171 = vcmask 261120
    %v173 = vsel %vm171, %v151, 0
    %v176 = vsel %vm171, %v152, 0
    %v179 = vsel %vm171, %v153, 0
    %v182 = vsel %vm171, %v154, 0
    %v185 = vsel %vm171, %v155, 0
    %v188 = vsel %vm171, %v156, 0
    %v191 = vsel %vm171, %v157, 0
    %v194 = vsel %vm171, %v158, 0
    %196 = vmatprep.subr.bf16.mxu0 0
    %197 = vmatpush1.bf16.msra.mxu0 %v167
    %198 = vmatprep.subr.bf16.mxu0 0
    %199 = vmatpush1.bf16.msra.mxu0 %v168
    %200 = vmatprep.subr.bf16.mxu0 0
    %201 = vmatpush1.bf16.msra.mxu0 0
    %202 = vmatprep.subr.bf16.mxu0 0
    %203 = vmatpush1.bf16.msra.mxu0 0
    %204 = vmatprep.subr.bf16.mxu0 0
    %205 = vmatpush1.bf16.msra.mxu0 0
    %206 = vmatprep.subr.bf16.mxu0 0
    %207 = vmatpush1.bf16.msra.mxu0 0
    %208 = vmatprep.subr.bf16.mxu0 0
    %209 = vmatpush1.bf16.msra.mxu0 0
    %210 = vmatprep.subr.bf16.mxu0 0
    %211 = vmatpush1.bf16.msra.mxu0 0
    %212 = vmatprep.subr.bf16.mxu0 0
    %213 = vmatpush1.bf16.msra.mxu0 0
    %214 = vmatprep.subr.bf16.mxu0 0
    %215 = vmatpush1.bf16.msra.mxu0 0
    %216 = vmatprep.subr.bf16.mxu0 0
    %217 = vmatpush1.bf16.msra.mxu0 0
    %218 = vmatprep.subr.bf16.mxu0 0
    %219 = vmatpush1.bf16.msra.mxu0 0
    %220 = vmatprep.subr.bf16.mxu0 0
    %221 = vmatpush1.bf16.msra.mxu0 0
    %222 = vmatprep.subr.bf16.mxu0 0
    %223 = vmatpush1.bf16.msra.mxu0 0
    %224 = vmatprep.subr.bf16.mxu0 0
    %225 = vmatpush1.bf16.msra.mxu0 0
    %226 = vmatprep.subr.bf16.mxu0 0
    %227 = vmatpush1.bf16.msra.mxu0 0
    %228 = vmatprep.mubr.bf16.mxu0 0
    %229 = vmatmul.mubr.bf16.gmra.mrb[0].mxu0 %v173
    %v230 = vpop.f32.mrb[0].mxu0
    %v231 = vadd.f32 0.0, %v230
    %v232 = vpop.f32.mrb[0].mxu0
    %v233 = vpop.f32.mrb[0].mxu0
    %v234 = vadd.f32 0.0, %v233
    %v235 = vpop.f32.mrb[0].mxu0
    %236 = vmatprep.mubr.bf16.mxu0 0
    %237 = vmatmul.mubr.bf16.gmra.mrb[0].mxu0 %v176
    %v238 = vpop.f32.mrb[0].mxu0
    %v239 = vadd.f32 0.0, %v238
    %v240 = vpop.f32.mrb[0].mxu0
    %v241 = vpop.f32.mrb[0].mxu0
    %v242 = vadd.f32 0.0, %v241
    %v243 = vpop.f32.mrb[0].mxu0
    %244 = vmatprep.mubr.bf16.mxu0 0
    %245 = vmatmul.mubr.bf16.gmra.mrb[0].mxu0 %v179
    %v246 = vpop.f32.mrb[0].mxu0
    %v247 = vadd.f32 0.0, %v246
    %v248 = vpop.f32.mrb[0].mxu0
    %v249 = vpop.f32.mrb[0].mxu0
    %v250 = vadd.f32 0.0, %v249
    %v251 = vpop.f32.mrb[0].mxu0
    %252 = vmatprep.mubr.bf16.mxu0 0
    %253 = vmatmul.mubr.bf16.gmra.mrb[0].mxu0 %v182
    %v254 = vpop.f32.mrb[0].mxu0
    %v255 = vadd.f32 0.0, %v254
    %v256 = vpop.f32.mrb[0].mxu0
    %v257 = vpop.f32.mrb[0].mxu0
    %v258 = vadd.f32 0.0, %v257
    %v259 = vpop.f32.mrb[0].mxu0
    %260 = vmatprep.mubr.bf16.mxu0 0
    %261 = vmatmul.mubr.bf16.gmra.mrb[0].mxu0 %v185
    %v262 = vpop.f32.mrb[0].mxu0
    %v263 = vadd.f32 0.0, %v262
    %v264 = vpop.f32.mrb[0].mxu0
    %v265 = vpop.f32.mrb[0].mxu0
    %v266 = vadd.f32 0.0, %v265
    %v267 = vpop.f32.mrb[0].mxu0
    %268 = vmatprep.mubr.bf16.mxu0 0
    %269 = vmatmul.mubr.bf16.gmra.mrb[0].mxu0 %v188
    %v270 = vpop.f32.mrb[0].mxu0
    %v271 = vadd.f32 0.0, %v270
    %v272 = vpop.f32.mrb[0].mxu0
    %v273 = vpop.f32.mrb[0].mxu0
    %v274 = vadd.f32 0.0, %v273
    %v275 = vpop.f32.mrb[0].mxu0
    %276 = vmatprep.mubr.bf16.mxu0 0
    %277 = vmatmul.mubr.bf16.gmra.mrb[0].mxu0 %v191
    %v278 = vpop.f32.mrb[0].mxu0
    %v279 = vadd.f32 0.0, %v278
    %v280 = vpop.f32.mrb[0].mxu0
    %v281 = vpop.f32.mrb[0].mxu0
    %v282 = vadd.f32 0.0, %v281
    %v283 = vpop.f32.mrb[0].mxu0
    %284 = vmatprep.mubr.bf16.mxu0 0
    %285 = vmatmul.mubr.bf16.gmra.mrb[0].mxu0 %v194
    %v286 = vpop.f32.mrb[0].mxu0
    %v287 = vadd.f32 0.0, %v286
    %v288 = vpop.f32.mrb[0].mxu0
    %v289 = vpop.f32.mrb[0].mxu0
    %v290 = vadd.f32 0.0, %v289
    %v291 = vpop.f32.mrb[0].mxu0
    %292 = vdwg.mxu0
    %v309 = vunpack.c.l.b16 %v79
    %v310 = vunpack.c.l.b16 %v80
    %v311 = vunpack.c.l.b16 %v81
    %v312 = vunpack.c.l.b16 %v82
    %v313 = vunpack.c.l.b16 %v83
    %v314 = vunpack.c.l.b16 %v84
    %v315 = vunpack.c.l.b16 %v85
    %v316 = vunpack.c.l.b16 %v86
    %v317 = vunpack.c.l.b16 %v87
    %v318 = vunpack.c.l.b16 %v88
    %v319 = vunpack.c.l.b16 %v89
    %v320 = vunpack.c.l.b16 %v90
    %v321 = vunpack.c.l.b16 %v91
    %v322 = vunpack.c.l.b16 %v92
    %v323 = vunpack.c.l.b16 %v93
    %v324 = vunpack.c.l.b16 %v94
    %v325 = vpack.c.b16 %v310, %v309
    %v326 = vpack.c.b16 %v312, %v311
    %v327 = vpack.c.b16 %v314, %v313
    %v328 = vpack.c.b16 %v316, %v315
    %v329 = vpack.c.b16 %v318, %v317
    %v330 = vpack.c.b16 %v320, %v319
    %v331 = vpack.c.b16 %v322, %v321
    %v332 = vpack.c.b16 %v324, %v323
    %v337 = vunpack.c.l.b16 %v95
    %v338 = vunpack.c.l.b16 %v96
    %v339 = vunpack.c.l.b16 %v97
    %v340 = vunpack.c.l.b16 %v98
    %v341 = vpack.c.b16 %v338, %v337
    %v342 = vpack.c.b16 %v340, %v339
    %v346 = vsel %vm171, %v325, 0
    %v349 = vsel %vm171, %v326, 0
    %v352 = vsel %vm171, %v327, 0
    %v355 = vsel %vm171, %v328, 0
    %v358 = vsel %vm171, %v329, 0
    %v361 = vsel %vm171, %v330, 0
    %v364 = vsel %vm171, %v331, 0
    %v367 = vsel %vm171, %v332, 0
    %369 = vmatprep.subr.bf16.mxu0 0
    %370 = vmatpush1.bf16.msra.mxu0 %v341
    %371 = vmatprep.subr.bf16.mxu0 0
    %372 = vmatpush1.bf16.msra.mxu0 %v342
    %373 = vmatprep.subr.bf16.mxu0 0
    %374 = vmatpush1.bf16.msra.mxu0 0
    %375 = vmatprep.subr.bf16.mxu0 0
    %376 = vmatpush1.bf16.msra.mxu0 0
    %377 = vmatprep.subr.bf16.mxu0 0
    %378 = vmatpush1.bf16.msra.mxu0 0
    %379 = vmatprep.subr.bf16.mxu0 0
    %380 = vmatpush1.bf16.msra.mxu0 0
    %381 = vmatprep.subr.bf16.mxu0 0
    %382 = vmatpush1.bf16.msra.mxu0 0
    %383 = vmatprep.subr.bf16.mxu0 0
    %384 = vmatpush1.bf16.msra.mxu0 0
    %385 = vmatprep.subr.bf16.mxu0 0
    %386 = vmatpush1.bf16.msra.mxu0 0
    %387 = vmatprep.subr.bf16.mxu0 0
    %388 = vmatpush1.bf16.msra.mxu0 0
    %389 = vmatprep.subr.bf16.mxu0 0
    %390 = vmatpush1.bf16.msra.mxu0 0
    %391 = vmatprep.subr.bf16.mxu0 0
    %392 = vmatpush1.bf16.msra.mxu0 0
    %393 = vmatprep.subr.bf16.mxu0 0
    %394 = vmatpush1.bf16.msra.mxu0 0
    %395 = vmatprep.subr.bf16.mxu0 0
    %396 = vmatpush1.bf16.msra.mxu0 0
    %397 = vmatprep.subr.bf16.mxu0 0
    %398 = vmatpush1.bf16.msra.mxu0 0
    %399 = vmatprep.subr.bf16.mxu0 0
    %400 = vmatpush1.bf16.msra.mxu0 0
    %401 = vmatprep.mubr.bf16.mxu0 0
    %402 = vmatmul.mubr.bf16.gmra.mrb[0].mxu0 %v346
    %v403 = vpop.f32.mrb[0].mxu0
    %v404 = vadd.f32 %v231, %v403
    %v405 = vpop.f32.mrb[0].mxu0
    %v406 = vpop.f32.mrb[0].mxu0
    %v407 = vadd.f32 %v234, %v406
    %v408 = vpop.f32.mrb[0].mxu0
    %409 = vmatprep.mubr.bf16.mxu0 0
    %410 = vmatmul.mubr.bf16.gmra.mrb[0].mxu0 %v349
    %v411 = vpop.f32.mrb[0].mxu0
    %v412 = vadd.f32 %v239, %v411
    %v413 = vpop.f32.mrb[0].mxu0
    %v414 = vpop.f32.mrb[0].mxu0
    %v415 = vadd.f32 %v242, %v414
    %v416 = vpop.f32.mrb[0].mxu0
    %417 = vmatprep.mubr.bf16.mxu0 0
    %418 = vmatmul.mubr.bf16.gmra.mrb[0].mxu0 %v352
    %v419 = vpop.f32.mrb[0].mxu0
    %v420 = vadd.f32 %v247, %v419
    %v421 = vpop.f32.mrb[0].mxu0
    %v422 = vpop.f32.mrb[0].mxu0
    %v423 = vadd.f32 %v250, %v422
    %v424 = vpop.f32.mrb[0].mxu0
    %425 = vmatprep.mubr.bf16.mxu0 0
    %426 = vmatmul.mubr.bf16.gmra.mrb[0].mxu0 %v355
    %v427 = vpop.f32.mrb[0].mxu0
    %v428 = vadd.f32 %v255, %v427
    %v429 = vpop.f32.mrb[0].mxu0
    %v430 = vpop.f32.mrb[0].mxu0
    %v431 = vadd.f32 %v258, %v430
    %v432 = vpop.f32.mrb[0].mxu0
    %433 = vmatprep.mubr.bf16.mxu0 0
    %434 = vmatmul.mubr.bf16.gmra.mrb[0].mxu0 %v358
    %v435 = vpop.f32.mrb[0].mxu0
    %v436 = vadd.f32 %v263, %v435
    %v437 = vpop.f32.mrb[0].mxu0
    %v438 = vpop.f32.mrb[0].mxu0
    %v439 = vadd.f32 %v266, %v438
    %v440 = vpop.f32.mrb[0].mxu0
    %441 = vmatprep.mubr.bf16.mxu0 0
    %442 = vmatmul.mubr.bf16.gmra.mrb[0].mxu0 %v361
    %v443 = vpop.f32.mrb[0].mxu0
    %v444 = vadd.f32 %v271, %v443
    %v445 = vpop.f32.mrb[0].mxu0
    %v446 = vpop.f32.mrb[0].mxu0
    %v447 = vadd.f32 %v274, %v446
    %v448 = vpop.f32.mrb[0].mxu0
    %449 = vmatprep.mubr.bf16.mxu0 0
    %450 = vmatmul.mubr.bf16.gmra.mrb[0].mxu0 %v364
    %v451 = vpop.f32.mrb[0].mxu0
    %v452 = vadd.f32 %v279, %v451
    %v453 = vpop.f32.mrb[0].mxu0
    %v454 = vpop.f32.mrb[0].mxu0
    %v455 = vadd.f32 %v282, %v454
    %v456 = vpop.f32.mrb[0].mxu0
    %457 = vmatprep.mubr.bf16.mxu0 0
    %458 = vmatmul.mubr.bf16.gmra.mrb[0].mxu0 %v367
    %v459 = vpop.f32.mrb[0].mxu0
    %v460 = vadd.f32 %v287, %v459
    %v461 = vpop.f32.mrb[0].mxu0
    %v462 = vpop.f32.mrb[0].mxu0
    %v463 = vadd.f32 %v290, %v462
    %v464 = vpop.f32.mrb[0].mxu0
    %465 = vdwg.mxu0
    %v466 = vld [vmem:[%s2] sm:$0xf]
    %v467 = vld [vmem:[%s2 + $0x4] sm:$0xf]
    %v468 = vld [vmem:[%s2 + $0x8] sm:$0xf]
    %v469 = vld [vmem:[%s2 + $0xc] sm:$0xf]
    %v470 = vld [vmem:[%s2 + $0x10] sm:$0xf]
    %v471 = vld [vmem:[%s2 + $0x14] sm:$0xf]
    %v472 = vld [vmem:[%s2 + $0x18] sm:$0xf]
    %v473 = vld [vmem:[%s2 + $0x1c] sm:$0xf]
    %v474 = vld [vmem:[%s2 + $0x20] sm:$0xf]
    %v475 = vld [vmem:[%s2 + $0x24] sm:$0xf]
    %v476 = vld [vmem:[%s2 + $0x28] sm:$0xf]
    %v477 = vld [vmem:[%s2 + $0x2c] sm:$0xf]
    %v478 = vld [vmem:[%s2 + $0x30] sm:$0xf]
    %v479 = vld [vmem:[%s2 + $0x34] sm:$0xf]
    %v480 = vld [vmem:[%s2 + $0x38] sm:$0xf]
    %v481 = vld [vmem:[%s2 + $0x3c] sm:$0xf]
    %v482 = vld [vmem:[%s8] sm:$0xf]
    %v483 = vld [vmem:[%s8 + $0x4] sm:$0xf]
    %v484 = vld [vmem:[%s8 + $0x8] sm:$0xf]
    %v485 = vld [vmem:[%s8 + $0xc] sm:$0xf]
    %v502 = vunpack.c.l.b16 %v466
    %v503 = vunpack.c.l.b16 %v467
    %v504 = vunpack.c.l.b16 %v468
    %v505 = vunpack.c.l.b16 %v469
    %v506 = vunpack.c.l.b16 %v470
    %v507 = vunpack.c.l.b16 %v471
    %v508 = vunpack.c.l.b16 %v472
    %v509 = vunpack.c.l.b16 %v473
    %v510 = vunpack.c.l.b16 %v474
    %v511 = vunpack.c.l.b16 %v475
    %v512 = vunpack.c.l.b16 %v476
    %v513 = vunpack.c.l.b16 %v477
    %v514 = vunpack.c.l.b16 %v478
    %v515 = vunpack.c.l.b16 %v479
    %v516 = vunpack.c.l.b16 %v480
    %v517 = vunpack.c.l.b16 %v481
    %v518 = vpack.c.b16 %v503, %v502
    %v519 = vpack.c.b16 %v505, %v504
    %v520 = vpack.c.b16 %v507, %v506
    %v521 = vpack.c.b16 %v509, %v508
    %v522 = vpack.c.b16 %v511, %v510
    %v523 = vpack.c.b16 %v513, %v512
    %v524 = vpack.c.b16 %v515, %v514
    %v525 = vpack.c.b16 %v517, %v516
    %v530 = vunpack.c.l.b16 %v482
    %v531 = vunpack.c.l.b16 %v483
    %v532 = vunpack.c.l.b16 %v484
    %v533 = vunpack.c.l.b16 %v485
    %v534 = vpack.c.b16 %v531, %v530
    %v535 = vpack.c.b16 %v533, %v532
    %v539 = vsel %vm171, %v518, 0
    %v542 = vsel %vm171, %v519, 0
    %v545 = vsel %vm171, %v520, 0
    %v548 = vsel %vm171, %v521, 0
    %v551 = vsel %vm171, %v522, 0
    %v554 = vsel %vm171, %v523, 0
    %v557 = vsel %vm171, %v524, 0
    %v560 = vsel %vm171, %v525, 0
    %562 = vmatprep.subr.bf16.mxu0 0
    %563 = vmatpush1.bf16.msra.mxu0 %v534
    %564 = vmatprep.subr.bf16.mxu0 0
    %565 = vmatpush1.bf16.msra.mxu0 %v535
    %566 = vmatprep.subr.bf16.mxu0 0
    %567 = vmatpush1.bf16.msra.mxu0 0
    %568 = vmatprep.subr.bf16.mxu0 0
    %569 = vmatpush1.bf16.msra.mxu0 0
    %570 = vmatprep.subr.bf16.mxu0 0
    %571 = vmatpush1.bf16.msra.mxu0 0
    %572 = vmatprep.subr.bf16.mxu0 0
    %573 = vmatpush1.bf16.msra.mxu0 0
    %574 = vmatprep.subr.bf16.mxu0 0
    %575 = vmatpush1.bf16.msra.mxu0 0
    %576 = vmatprep.subr.bf16.mxu0 0
    %577 = vmatpush1.bf16.msra.mxu0 0
    %578 = vmatprep.subr.bf16.mxu0 0
    %579 = vmatpush1.bf16.msra.mxu0 0
    %580 = vmatprep.subr.bf16.mxu0 0
    %581 = vmatpush1.bf16.msra.mxu0 0
    %582 = vmatprep.subr.bf16.mxu0 0
    %583 = vmatpush1.bf16.msra.mxu0 0
    %584 = vmatprep.subr.bf16.mxu0 0
    %585 = vmatpush1.bf16.msra.mxu0 0
    %586 = vmatprep.subr.bf16.mxu0 0
    %587 = vmatpush1.bf16.msra.mxu0 0
    %588 = vmatprep.subr.bf16.mxu0 0
    %589 = vmatpush1.bf16.msra.mxu0 0
    %590 = vmatprep.subr.bf16.mxu0 0
    %591 = vmatpush1.bf16.msra.mxu0 0
    %592 = vmatprep.subr.bf16.mxu0 0
    %593 = vmatpush1.bf16.msra.mxu0 0
    %594 = vmatprep.mubr.bf16.mxu0 0
    %595 = vmatmul.mubr.bf16.gmra.mrb[0].mxu0 %v539
    %v596 = vpop.f32.mrb[0].mxu0
    %v597 = vadd.f32 0.0, %v596
    %v598 = vpop.f32.mrb[0].mxu0
    %v599 = vpop.f32.mrb[0].mxu0
    %v600 = vadd.f32 0.0, %v599
    %v601 = vpop.f32.mrb[0].mxu0
    %602 = vmatprep.mubr.bf16.mxu0 0
    %603 = vmatmul.mubr.bf16.gmra.mrb[0].mxu0 %v542
    %v604 = vpop.f32.mrb[0].mxu0
    %v605 = vadd.f32 0.0, %v604
    %v606 = vpop.f32.mrb[0].mxu0
    %v607 = vpop.f32.mrb[0].mxu0
    %v608 = vadd.f32 0.0, %v607
    %v609 = vpop.f32.mrb[0].mxu0
    %610 = vmatprep.mubr.bf16.mxu0 0
    %611 = vmatmul.mubr.bf16.gmra.mrb[0].mxu0 %v545
    %v612 = vpop.f32.mrb[0].mxu0
    %v613 = vadd.f32 0.0, %v612
    %v614 = vpop.f32.mrb[0].mxu0
    %v615 = vpop.f32.mrb[0].mxu0
    %v616 = vadd.f32 0.0, %v615
    %v617 = vpop.f32.mrb[0].mxu0
    %618 = vmatprep.mubr.bf16.mxu0 0
    %619 = vmatmul.mubr.bf16.gmra.mrb[0].mxu0 %v548
    %v620 = vpop.f32.mrb[0].mxu0
    %v621 = vadd.f32 0.0, %v620
    %v622 = vpop.f32.mrb[0].mxu0
    %v623 = vpop.f32.mrb[0].mxu0
    %v624 = vadd.f32 0.0, %v623
    %v625 = vpop.f32.mrb[0].mxu0
    %626 = vmatprep.mubr.bf16.mxu0 0
    %627 = vmatmul.mubr.bf16.gmra.mrb[0].mxu0 %v551
    %v628 = vpop.f32.mrb[0].mxu0
    %v629 = vadd.f32 0.0, %v628
    %v630 = vpop.f32.mrb[0].mxu0
    %v631 = vpop.f32.mrb[0].mxu0
    %v632 = vadd.f32 0.0, %v631
    %v633 = vpop.f32.mrb[0].mxu0
    %634 = vmatprep.mubr.bf16.mxu0 0
    %635 = vmatmul.mubr.bf16.gmra.mrb[0].mxu0 %v554
    %v636 = vpop.f32.mrb[0].mxu0
    %v637 = vadd.f32 0.0, %v636
    %v638 = vpop.f32.mrb[0].mxu0
    %v639 = vpop.f32.mrb[0].mxu0
    %v640 = vadd.f32 0.0, %v639
    %v641 = vpop.f32.mrb[0].mxu0
    %642 = vmatprep.mubr.bf16.mxu0 0
    %643 = vmatmul.mubr.bf16.gmra.mrb[0].mxu0 %v557
    %v644 = vpop.f32.mrb[0].mxu0
    %v645 = vadd.f32 0.0, %v644
    %v646 = vpop.f32.mrb[0].mxu0
    %v647 = vpop.f32.mrb[0].mxu0
    %v648 = vadd.f32 0.0, %v647
    %v649 = vpop.f32.mrb[0].mxu0
    %650 = vmatprep.mubr.bf16.mxu0 0
    %651 = vmatmul.mubr.bf16.gmra.mrb[0].mxu0 %v560
    %v652 = vpop.f32.mrb[0].mxu0
    %v653 = vadd.f32 0.0, %v652
    %v654 = vpop.f32.mrb[0].mxu0
    %v655 = vpop.f32.mrb[0].mxu0
    %v656 = vadd.f32 0.0, %v655
    %v657 = vpop.f32.mrb[0].mxu0
    %658 = vdwg.mxu0
    %v659 = vadd.f32 %v404, %v597
    %v660 = vadd.f32 %v407, %v600
    %v661 = vadd.f32 %v412, %v605
    %v662 = vadd.f32 %v415, %v608
    %v663 = vadd.f32 %v420, %v613
    %v664 = vadd.f32 %v423, %v616
    %v665 = vadd.f32 %v428, %v621
    %v666 = vadd.f32 %v431, %v624
    %v667 = vadd.f32 %v436, %v629
    %v668 = vadd.f32 %v439, %v632
    %v669 = vadd.f32 %v444, %v637
    %v670 = vadd.f32 %v447, %v640
    %v671 = vadd.f32 %v452, %v645
    %v672 = vadd.f32 %v455, %v648
    %v673 = vadd.f32 %v460, %v653
    %v674 = vadd.f32 %v463, %v656
    %v675 = vld [vmem:[%s9] sm:$0x1]
    %v677 = vlaneseq
    %v678 = vshrl.u32 %v677, 7
    %v679 = vsub.s32 0, %v678
    %v680 = vrot.slane %v675, %v679
    %v682 = vadd.f32 %v659, %v680
    %v683 = vadd.f32 %v660, %v680
    %v684 = vadd.f32 %v661, %v680
    %v685 = vadd.f32 %v662, %v680
    %v686 = vadd.f32 %v663, %v680
    %v687 = vadd.f32 %v664, %v680
    %v688 = vadd.f32 %v665, %v680
    %v689 = vadd.f32 %v666, %v680
    %v690 = vadd.f32 %v667, %v680
    %v691 = vadd.f32 %v668, %v680
    %v692 = vadd.f32 %v669, %v680
    %v693 = vadd.f32 %v670, %v680
    %v694 = vadd.f32 %v671, %v680
    %v695 = vadd.f32 %v672, %v680
    %v696 = vadd.f32 %v673, %v680
    %v697 = vadd.f32 %v674, %v680
    %v698 = vmax.f32 %v682, 0.0
    %v699 = vmax.f32 %v683, 0.0
    %v700 = vmax.f32 %v684, 0.0
    %v701 = vmax.f32 %v685, 0.0
    %v702 = vmax.f32 %v686, 0.0
    %v703 = vmax.f32 %v687, 0.0
    %v704 = vmax.f32 %v688, 0.0
    %v705 = vmax.f32 %v689, 0.0
    %v706 = vmax.f32 %v690, 0.0
    %v707 = vmax.f32 %v691, 0.0
    %v708 = vmax.f32 %v692, 0.0
    %v709 = vmax.f32 %v693, 0.0
    %v710 = vmax.f32 %v694, 0.0
    %v711 = vmax.f32 %v695, 0.0
    %v712 = vmax.f32 %v696, 0.0
    %v713 = vmax.f32 %v697, 0.0
    %v714 = vpack.c.bf16 %v699, %v698
    %v715 = vpack.c.bf16 %v701, %v700
    %v716 = vpack.c.bf16 %v703, %v702
    %v717 = vpack.c.bf16 %v705, %v704
    %v718 = vpack.c.bf16 %v707, %v706
    %v719 = vpack.c.bf16 %v709, %v708
    %v720 = vpack.c.bf16 %v711, %v710
    %v721 = vpack.c.bf16 %v713, %v712
    %v722 = vld [vmem:[%s10] sm:$0xf]
    %v723 = vld [vmem:[%s10 + $0x4] sm:$0xf]
    %v724 = vld [vmem:[%s10 + $0x8] sm:$0xf]
    %v725 = vld [vmem:[%s10 + $0xc] sm:$0xf]
    %v726 = vld [vmem:[%s10 + $0x10] sm:$0xf]
    %v727 = vld [vmem:[%s10 + $0x14] sm:$0xf]
    %v728 = vld [vmem:[%s10 + $0x18] sm:$0xf]
    %v729 = vld [vmem:[%s10 + $0x1c] sm:$0xf]
    %v730 = vld [vmem:[%s10 + $0x20] sm:$0xf]
    %v731 = vld [vmem:[%s10 + $0x24] sm:$0xf]
    %v732 = vld [vmem:[%s10 + $0x28] sm:$0xf]
    %v733 = vld [vmem:[%s10 + $0x2c] sm:$0xf]
    %v734 = vld [vmem:[%s10 + $0x30] sm:$0xf]
    %v735 = vld [vmem:[%s10 + $0x34] sm:$0xf]
    %v736 = vld [vmem:[%s10 + $0x38] sm:$0xf]
    %v737 = vld [vmem:[%s10 + $0x3c] sm:$0xf]
    %v738 = vld [vmem:[%s11] sm:$0x1]
    %v740 = vlaneseq
    %v741 = vshrl.u32 %v740, 7
    %v742 = vsub.s32 0, %v741
    %v743 = vrot.slane %v738, %v742
    %v761 = vunpack.c.l.b16 %v722
    %v762 = vunpack.c.l.b16 %v723
    %v763 = vunpack.c.l.b16 %v724
    %v764 = vunpack.c.l.b16 %v725
    %v765 = vunpack.c.l.b16 %v726
    %v766 = vunpack.c.l.b16 %v727
    %v767 = vunpack.c.l.b16 %v728
    %v768 = vunpack.c.l.b16 %v729
    %v769 = vunpack.c.l.b16 %v730
    %v770 = vunpack.c.l.b16 %v731
    %v771 = vunpack.c.l.b16 %v732
    %v772 = vunpack.c.l.b16 %v733
    %v773 = vunpack.c.l.b16 %v734
    %v774 = vunpack.c.l.b16 %v735
    %v775 = vunpack.c.l.b16 %v736
    %v776 = vunpack.c.l.b16 %v737
    %v777 = vpack.c.b16 %v762, %v761
    %v778 = vpack.c.b16 %v764, %v763
    %v779 = vpack.c.b16 %v766, %v765
    %v780 = vpack.c.b16 %v768, %v767
    %v781 = vpack.c.b16 %v770, %v769
    %v782 = vpack.c.b16 %v772, %v771
    %v783 = vpack.c.b16 %v774, %v773
    %v784 = vpack.c.b16 %v776, %v775
    %793 = vmatprep.subr.bf16.mxu0 0
    %794 = vmatpush1.bf16.msra.mxu0 %v777
    %795 = vmatprep.subr.bf16.mxu0 0
    %796 = vmatpush1.bf16.msra.mxu0 %v778
    %797 = vmatprep.subr.bf16.mxu0 0
    %798 = vmatpush1.bf16.msra.mxu0 %v779
    %799 = vmatprep.subr.bf16.mxu0 0
    %800 = vmatpush1.bf16.msra.mxu0 %v780
    %801 = vmatprep.subr.bf16.mxu0 0
    %802 = vmatpush1.bf16.msra.mxu0 %v781
    %803 = vmatprep.subr.bf16.mxu0 0
    %804 = vmatpush1.bf16.msra.mxu0 %v782
    %805 = vmatprep.subr.bf16.mxu0 0
    %806 = vmatpush1.bf16.msra.mxu0 %v783
    %807 = vmatprep.subr.bf16.mxu0 0
    %808 = vmatpush1.bf16.msra.mxu0 %v784
    %809 = vmatprep.subr.bf16.mxu0 0
    %810 = vmatpush1.bf16.msra.mxu0 0
    %811 = vmatprep.subr.bf16.mxu0 0
    %812 = vmatpush1.bf16.msra.mxu0 0
    %813 = vmatprep.subr.bf16.mxu0 0
    %814 = vmatpush1.bf16.msra.mxu0 0
    %815 = vmatprep.subr.bf16.mxu0 0
    %816 = vmatpush1.bf16.msra.mxu0 0
    %817 = vmatprep.subr.bf16.mxu0 0
    %818 = vmatpush1.bf16.msra.mxu0 0
    %819 = vmatprep.subr.bf16.mxu0 0
    %820 = vmatpush1.bf16.msra.mxu0 0
    %821 = vmatprep.subr.bf16.mxu0 0
    %822 = vmatpush1.bf16.msra.mxu0 0
    %823 = vmatprep.subr.bf16.mxu0 0
    %824 = vmatpush1.bf16.msra.mxu0 0
    %825 = vmatprep.mubr.bf16.mxu0 0
    %826 = vmatmul.mubr.bf16.gmra.mrb[0].mxu0 %v714
    %v827 = vpop.f32.mrb[0].mxu0
    %v828 = vadd.f32 %v743, %v827
    %v829 = vpop.f32.mrb[0].mxu0
    %v830 = vpop.f32.mrb[0].mxu0
    %v831 = vadd.f32 %v743, %v830
    %v832 = vpop.f32.mrb[0].mxu0
    %833 = vmatprep.mubr.bf16.mxu0 0
    %834 = vmatmul.mubr.bf16.gmra.mrb[0].mxu0 %v715
    %v835 = vpop.f32.mrb[0].mxu0
    %v836 = vadd.f32 %v743, %v835
    %v837 = vpop.f32.mrb[0].mxu0
    %v838 = vpop.f32.mrb[0].mxu0
    %v839 = vadd.f32 %v743, %v838
    %v840 = vpop.f32.mrb[0].mxu0
    %841 = vmatprep.mubr.bf16.mxu0 0
    %842 = vmatmul.mubr.bf16.gmra.mrb[0].mxu0 %v716
    %v843 = vpop.f32.mrb[0].mxu0
    %v844 = vadd.f32 %v743, %v843
    %v845 = vpop.f32.mrb[0].mxu0
    %v846 = vpop.f32.mrb[0].mxu0
    %v847 = vadd.f32 %v743, %v846
    %v848 = vpop.f32.mrb[0].mxu0
    %849 = vmatprep.mubr.bf16.mxu0 0
    %850 = vmatmul.mubr.bf16.gmra.mrb[0].mxu0 %v717
    %v851 = vpop.f32.mrb[0].mxu0
    %v852 = vadd.f32 %v743, %v851
    %v853 = vpop.f32.mrb[0].mxu0
    %v854 = vpop.f32.mrb[0].mxu0
    %v855 = vadd.f32 %v743, %v854
    %v856 = vpop.f32.mrb[0].mxu0
    %857 = vmatprep.mubr.bf16.mxu0 0
    %858 = vmatmul.mubr.bf16.gmra.mrb[0].mxu0 %v718
    %v859 = vpop.f32.mrb[0].mxu0
    %v860 = vadd.f32 %v743, %v859
    %v861 = vpop.f32.mrb[0].mxu0
    %v862 = vpop.f32.mrb[0].mxu0
    %v863 = vadd.f32 %v743, %v862
    %v864 = vpop.f32.mrb[0].mxu0
    %865 = vmatprep.mubr.bf16.mxu0 0
    %866 = vmatmul.mubr.bf16.gmra.mrb[0].mxu0 %v719
    %v867 = vpop.f32.mrb[0].mxu0
    %v868 = vadd.f32 %v743, %v867
    %v869 = vpop.f32.mrb[0].mxu0
    %v870 = vpop.f32.mrb[0].mxu0
    %v871 = vadd.f32 %v743, %v870
    %v872 = vpop.f32.mrb[0].mxu0
    %873 = vmatprep.mubr.bf16.mxu0 0
    %874 = vmatmul.mubr.bf16.gmra.mrb[0].mxu0 %v720
    %v875 = vpop.f32.mrb[0].mxu0
    %v876 = vadd.f32 %v743, %v875
    %v877 = vpop.f32.mrb[0].mxu0
    %v878 = vpop.f32.mrb[0].mxu0
    %v879 = vadd.f32 %v743, %v878
    %v880 = vpop.f32.mrb[0].mxu0
    %881 = vmatprep.mubr.bf16.mxu0 0
    %882 = vmatmul.mubr.bf16.gmra.mrb[0].mxu0 %v721
    %v883 = vpop.f32.mrb[0].mxu0
    %v884 = vadd.f32 %v743, %v883
    %v885 = vpop.f32.mrb[0].mxu0
    %v886 = vpop.f32.mrb[0].mxu0
    %v887 = vadd.f32 %v743, %v886
    %v888 = vpop.f32.mrb[0].mxu0
    %889 = vdwg.mxu0
    %v890 = vmax.f32 %v828, 0.0
    %v891 = vmax.f32 %v831, 0.0
    %v892 = vmax.f32 %v836, 0.0
    %v893 = vmax.f32 %v839, 0.0
    %v894 = vmax.f32 %v844, 0.0
    %v895 = vmax.f32 %v847, 0.0
    %v896 = vmax.f32 %v852, 0.0
    %v897 = vmax.f32 %v855, 0.0
    %v898 = vmax.f32 %v860, 0.0
    %v899 = vmax.f32 %v863, 0.0
    %v900 = vmax.f32 %v868, 0.0
    %v901 = vmax.f32 %v871, 0.0
    %v902 = vmax.f32 %v876, 0.0
    %v903 = vmax.f32 %v879, 0.0
    %v904 = vmax.f32 %v884, 0.0
    %v905 = vmax.f32 %v887, 0.0
    %v906 = vpack.c.bf16 %v891, %v890
    %v907 = vpack.c.bf16 %v893, %v892
    %v908 = vpack.c.bf16 %v895, %v894
    %v909 = vpack.c.bf16 %v897, %v896
    %v910 = vpack.c.bf16 %v899, %v898
    %v911 = vpack.c.bf16 %v901, %v900
    %v912 = vpack.c.bf16 %v903, %v902
    %v913 = vpack.c.bf16 %v905, %v904
    %v914 = vld [vmem:[%s12] sm:$0xf]
    %v915 = vld [vmem:[%s12 + $0x4] sm:$0xf]
    %v916 = vld [vmem:[%s12 + $0x8] sm:$0xf]
    %v917 = vld [vmem:[%s12 + $0xc] sm:$0xf]
    %v918 = vld [vmem:[%s12 + $0x10] sm:$0xf]
    %v919 = vld [vmem:[%s12 + $0x14] sm:$0xf]
    %v920 = vld [vmem:[%s12 + $0x18] sm:$0xf]
    %v921 = vld [vmem:[%s12 + $0x1c] sm:$0xf]
    %v922 = vld [vmem:[%s13] sm:$0x1]
    %v924 = vlaneseq
    %v925 = vshrl.u32 %v924, 7
    %v926 = vsub.s32 0, %v925
    %v927 = vrot.slane %v922, %v926
    %v937 = vunpack.c.l.b16 %v914
    %v938 = vunpack.c.l.b16 %v915
    %v939 = vunpack.c.l.b16 %v916
    %v940 = vunpack.c.l.b16 %v917
    %v941 = vunpack.c.l.b16 %v918
    %v942 = vunpack.c.l.b16 %v919
    %v943 = vunpack.c.l.b16 %v920
    %v944 = vunpack.c.l.b16 %v921
    %v945 = vpack.c.b16 %v938, %v937
    %v946 = vpack.c.b16 %v940, %v939
    %v947 = vpack.c.b16 %v942, %v941
    %v948 = vpack.c.b16 %v944, %v943
    %vm953 = vcmask 523264
    %v955 = vsel %vm953, %v906, 0
    %v958 = vsel %vm953, %v907, 0
    %v961 = vsel %vm953, %v908, 0
    %v964 = vsel %vm953, %v909, 0
    %v967 = vsel %vm953, %v910, 0
    %v970 = vsel %vm953, %v911, 0
    %v973 = vsel %vm953, %v912, 0
    %v976 = vsel %vm953, %v913, 0
    %978 = vmatprep.subr.bf16.mxu0 0
    %979 = vmatpush1.bf16.msra.mxu0 %v945
    %980 = vmatprep.subr.bf16.mxu0 0
    %981 = vmatpush1.bf16.msra.mxu0 %v946
    %982 = vmatprep.subr.bf16.mxu0 0
    %983 = vmatpush1.bf16.msra.mxu0 %v947
    %984 = vmatprep.subr.bf16.mxu0 0
    %985 = vmatpush1.bf16.msra.mxu0 %v948
    %986 = vmatprep.subr.bf16.mxu0 0
    %987 = vmatpush1.bf16.msra.mxu0 0
    %988 = vmatprep.subr.bf16.mxu0 0
    %989 = vmatpush1.bf16.msra.mxu0 0
    %990 = vmatprep.subr.bf16.mxu0 0
    %991 = vmatpush1.bf16.msra.mxu0 0
    %992 = vmatprep.subr.bf16.mxu0 0
    %993 = vmatpush1.bf16.msra.mxu0 0
    %994 = vmatprep.subr.bf16.mxu0 0
    %995 = vmatpush1.bf16.msra.mxu0 0
    %996 = vmatprep.subr.bf16.mxu0 0
    %997 = vmatpush1.bf16.msra.mxu0 0
    %998 = vmatprep.subr.bf16.mxu0 0
    %999 = vmatpush1.bf16.msra.mxu0 0
    %1000 = vmatprep.subr.bf16.mxu0 0
    %1001 = vmatpush1.bf16.msra.mxu0 0
    %1002 = vmatprep.subr.bf16.mxu0 0
    %1003 = vmatpush1.bf16.msra.mxu0 0
    %1004 = vmatprep.subr.bf16.mxu0 0
    %1005 = vmatpush1.bf16.msra.mxu0 0
    %1006 = vmatprep.subr.bf16.mxu0 0
    %1007 = vmatpush1.bf16.msra.mxu0 0
    %1008 = vmatprep.subr.bf16.mxu0 0
    %1009 = vmatpush1.bf16.msra.mxu0 0
    %1010 = vmatprep.mubr.bf16.mxu0 0
    %1011 = vmatmul.mubr.bf16.gmra.mrb[0].mxu0 %v955
    %v1012 = vpop.f32.mrb[0].mxu0
    %v1013 = vadd.f32 %v927, %v1012
    %v1014 = vpop.f32.mrb[0].mxu0
    %v1015 = vpop.f32.mrb[0].mxu0
    %v1016 = vadd.f32 %v927, %v1015
    %v1017 = vpop.f32.mrb[0].mxu0
    %1018 = vmatprep.mubr.bf16.mxu0 0
    %1019 = vmatmul.mubr.bf16.gmra.mrb[0].mxu0 %v958
    %v1020 = vpop.f32.mrb[0].mxu0
    %v1021 = vadd.f32 %v927, %v1020
    %v1022 = vpop.f32.mrb[0].mxu0
    %v1023 = vpop.f32.mrb[0].mxu0
    %v1024 = vadd.f32 %v927, %v1023
    %v1025 = vpop.f32.mrb[0].mxu0
    %1026 = vmatprep.mubr.bf16.mxu0 0
    %1027 = vmatmul.mubr.bf16.gmra.mrb[0].mxu0 %v961
    %v1028 = vpop.f32.mrb[0].mxu0
    %v1029 = vadd.f32 %v927, %v1028
    %v1030 = vpop.f32.mrb[0].mxu0
    %v1031 = vpop.f32.mrb[0].mxu0
    %v1032 = vadd.f32 %v927, %v1031
    %v1033 = vpop.f32.mrb[0].mxu0
    %1034 = vmatprep.mubr.bf16.mxu0 0
    %1035 = vmatmul.mubr.bf16.gmra.mrb[0].mxu0 %v964
    %v1036 = vpop.f32.mrb[0].mxu0
    %v1037 = vadd.f32 %v927, %v1036
    %v1038 = vpop.f32.mrb[0].mxu0
    %v1039 = vpop.f32.mrb[0].mxu0
    %v1040 = vadd.f32 %v927, %v1039
    %v1041 = vpop.f32.mrb[0].mxu0
    %1042 = vmatprep.mubr.bf16.mxu0 0
    %1043 = vmatmul.mubr.bf16.gmra.mrb[0].mxu0 %v967
    %v1044 = vpop.f32.mrb[0].mxu0
    %v1045 = vadd.f32 %v927, %v1044
    %v1046 = vpop.f32.mrb[0].mxu0
    %v1047 = vpop.f32.mrb[0].mxu0
    %v1048 = vadd.f32 %v927, %v1047
    %v1049 = vpop.f32.mrb[0].mxu0
    %1050 = vmatprep.mubr.bf16.mxu0 0
    %1051 = vmatmul.mubr.bf16.gmra.mrb[0].mxu0 %v970
    %v1052 = vpop.f32.mrb[0].mxu0
    %v1053 = vadd.f32 %v927, %v1052
    %v1054 = vpop.f32.mrb[0].mxu0
    %v1055 = vpop.f32.mrb[0].mxu0
    %v1056 = vadd.f32 %v927, %v1055
    %v1057 = vpop.f32.mrb[0].mxu0
    %1058 = vmatprep.mubr.bf16.mxu0 0
    %1059 = vmatmul.mubr.bf16.gmra.mrb[0].mxu0 %v973
    %v1060 = vpop.f32.mrb[0].mxu0
    %v1061 = vadd.f32 %v927, %v1060
    %v1062 = vpop.f32.mrb[0].mxu0
    %v1063 = vpop.f32.mrb[0].mxu0
    %v1064 = vadd.f32 %v927, %v1063
    %v1065 = vpop.f32.mrb[0].mxu0
    %1066 = vmatprep.mubr.bf16.mxu0 0
    %1067 = vmatmul.mubr.bf16.gmra.mrb[0].mxu0 %v976
    %v1068 = vpop.f32.mrb[0].mxu0
    %v1069 = vadd.f32 %v927, %v1068
    %v1070 = vpop.f32.mrb[0].mxu0
    %v1071 = vpop.f32.mrb[0].mxu0
    %v1072 = vadd.f32 %v927, %v1071
    %v1073 = vpop.f32.mrb[0].mxu0
    %1074 = vdwg.mxu0
    %1075 = vst.msk [vmem:[%s22] sm:$0xff] %vm171, %v1013
    %1076 = vst.msk [vmem:[%s22 + $0x8] sm:$0xff] %vm171, %v1016
    %1077 = vst.msk [vmem:[%s22 + $0x10] sm:$0xff] %vm171, %v1021
    %1078 = vst.msk [vmem:[%s22 + $0x18] sm:$0xff] %vm171, %v1024
    %1079 = vst.msk [vmem:[%s22 + $0x20] sm:$0xff] %vm171, %v1029
    %1080 = vst.msk [vmem:[%s22 + $0x28] sm:$0xff] %vm171, %v1032
    %1081 = vst.msk [vmem:[%s22 + $0x30] sm:$0xff] %vm171, %v1037
    %1082 = vst.msk [vmem:[%s22 + $0x38] sm:$0xff] %vm171, %v1040
    %1083 = vst.msk [vmem:[%s22 + $0x40] sm:$0xff] %vm171, %v1045
    %1084 = vst.msk [vmem:[%s22 + $0x48] sm:$0xff] %vm171, %v1048
    %1085 = vst.msk [vmem:[%s22 + $0x50] sm:$0xff] %vm171, %v1053
    %1086 = vst.msk [vmem:[%s22 + $0x58] sm:$0xff] %vm171, %v1056
    %1087 = vst.msk [vmem:[%s22 + $0x60] sm:$0xff] %vm171, %v1061
    %1088 = vst.msk [vmem:[%s22 + $0x68] sm:$0xff] %vm171, %v1064
    %1089 = vst.msk [vmem:[%s22 + $0x70] sm:$0xff] %vm171, %v1069
    %1090 = vst.msk [vmem:[%s22 + $0x78] sm:$0xff] %vm171, %v1072
    %v1091 = vlaneseq
    %v1092 = vshrl.u32 %v1091, 7
    %v1093 = vadd.s32 %v1092, 8
    %v1094 = vld [vmem:[%s3] sm:$0x1]
    %v1095 = vlaneseq
    %v1096 = vshrl.u32 %v1095, 7
    %v1097 = vsub.s32 0, %v1096
    %v1098 = vrot.slane %v1094, %v1097
    %vm1099 = vcmp.eq.s32.totalorder %v1092, %v1098
    %vm1100 = vcmp.eq.s32.totalorder %v1093, %v1098
    %v1101 = vsel %vm1099, 1, 0
    %v1102 = vsel %vm1100, 1, 0
    %v1103 = vcvt.s32.f32 %v1101
    %v1104 = vcvt.s32.f32 %v1102
    %v1105 = vpack.c.bf16 %v1104, %v1103
    %v1106 = vld [vmem:[#allocation2] sm:$0xff]
    %v1107 = vld [vmem:[#allocation2 + $0x8] sm:$0xff]
    %v1108 = vpack.c.bf16 %v1016, %v1013
    %v1109 = vpack.c.bf16 %v1024, %v1021
    %v1110 = vpack.c.bf16 %v1032, %v1029
    %v1111 = vpack.c.bf16 %v1040, %v1037
    %v1112 = vpack.c.bf16 %v1048, %v1045
    %v1113 = vpack.c.bf16 %v1056, %v1053
    %v1114 = vpack.c.bf16 %v1064, %v1061
    %v1115 = vpack.c.bf16 %v1072, %v1069
    %1116 = vmatprep.subr.bf16.mxu0 0
    %1117 = vmatpush1.bf16.msra.mxu0 %v1108
    %1118 = vmatprep.subr.bf16.mxu0 0
    %1119 = vmatpush1.bf16.msra.mxu0 %v1109
    %1120 = vmatprep.subr.bf16.mxu0 0
    %1121 = vmatpush1.bf16.msra.mxu0 %v1110
    %1122 = vmatprep.subr.bf16.mxu0 0
    %1123 = vmatpush1.bf16.msra.mxu0 %v1111
    %1124 = vmatprep.subr.bf16.mxu0 0
    %1125 = vmatpush1.bf16.msra.mxu0 %v1112
    %1126 = vmatprep.subr.bf16.mxu0 0
    %1127 = vmatpush1.bf16.msra.mxu0 %v1113
    %1128 = vmatprep.subr.bf16.mxu0 0
    %1129 = vmatpush1.bf16.msra.mxu0 %v1114
    %1130 = vmatprep.subr.bf16.mxu0 0
    %1131 = vmatpush1.bf16.msra.mxu0 %v1115
    %1132 = vmatprep.subr.bf16.mxu0 0
    %1133 = vmatpush1.bf16.msra.mxu0 0
    %1134 = vmatprep.subr.bf16.mxu0 0
    %1135 = vmatpush1.bf16.msra.mxu0 0
    %1136 = vmatprep.subr.bf16.mxu0 0
    %1137 = vmatpush1.bf16.msra.mxu0 0
    %1138 = vmatprep.subr.bf16.mxu0 0
    %1139 = vmatpush1.bf16.msra.mxu0 0
    %1140 = vmatprep.subr.bf16.mxu0 0
    %1141 = vmatpush1.bf16.msra.mxu0 0
    %1142 = vmatprep.subr.bf16.mxu0 0
    %1143 = vmatpush1.bf16.msra.mxu0 0
    %1144 = vmatprep.subr.bf16.mxu0 0
    %1145 = vmatpush1.bf16.msra.mxu0 0
    %1146 = vmatprep.subr.bf16.mxu0 0
    %1147 = vmatpush1.bf16.msra.mxu0 0
    %1148 = vmatprep.mubr.bf16.mxu0 0
    %1149 = vmatmul.mubr.bf16.gmra.mrb[0].mxu0 %v1105
    %v1150 = vpop.f32.mrb[0].mxu0
    %v1151 = vadd.f32 0.0, %v1150
    %v1152 = vpop.f32.mrb[0].mxu0
    %v1153 = vpop.f32.mrb[0].mxu0
    %v1154 = vadd.f32 0.0, %v1153
    %v1155 = vpop.f32.mrb[0].mxu0
    %1156 = vdwg.mxu0
    %v1157 = vadd.f32 %v1106, %v1151
    %v1158 = vadd.f32 %v1107, %v1154
    %1159 = vst.msk [vmem:[#allocation2] sm:$0xff] %vm171, %v1157
    %1160 = vst.msk [vmem:[#allocation2 + $0x8] sm:$0xff] %vm171, %v1158
    // Predicated region
    $region90: #{megnet_layer.1} parent=1 // pred_check
      %p1161 = pneg %p72
    $region91: #{megnet_layer.1} parent=1 // pred_check_branch
      %1163 = sbr.rel (%p1161) target = $region93
    $region92: #{megnet_layer.1} parent=1 // pred_region
      %v1164 = vld [vmem:[#allocation2] sm:$0xff]
      %v1165 = vld [vmem:[#allocation2 + $0x8] sm:$0xff]
      %v1166 = vld [vmem:[%s4] sm:$0xff]
      %v1167 = vld [vmem:[%s4 + $0x8] sm:$0xff]
      %1169 = vset.pattern.permute.xlu0 0
      %1170 = vperm.xlu0 %1169, %v1166
      %v1171 = vpop.permute.xlu0 %1170
      %1174 = vset.pattern.permute.xlu0 0
      %1175 = vperm.xlu0 %1174, %v1167
      %v1176 = vpop.permute.xlu0 %1175
      %v1178 = vmul.f32 %v1164, %v1171
      %v1179 = vmul.f32 %v1165, %v1176
      %v1180 = vpack.c.bf16 %v1179, %v1178
      %v1181 = vld [vmem:[%s14] sm:$0xf]
      %v1182 = vld [vmem:[%s14 + $0x4] sm:$0xf]
      %v1183 = vld [vmem:[%s14 + $0x8] sm:$0xf]
      %v1184 = vld [vmem:[%s14 + $0xc] sm:$0xf]
      %v1185 = vld [vmem:[%s5] sm:$0xf]
      %v1186 = vld [vmem:[%s5 + $0x4] sm:$0xf]
      %v1187 = vld [vmem:[%s15] sm:$0xf]
      %v1188 = vld [vmem:[%s15 + $0x4] sm:$0xf]
      %v1189 = vld [vmem:[%s15 + $0x8] sm:$0xf]
      %v1190 = vld [vmem:[%s15 + $0xc] sm:$0xf]
      %v1193 = vunpack.c.l.b16 %v1185
      %v1194 = vunpack.c.l.b16 %v1186
      %v1195 = vpack.c.b16 %v1194, %v1193
      %v1200 = vunpack.c.l.b16 %v1187
      %v1201 = vunpack.c.l.b16 %v1188
      %v1202 = vunpack.c.l.b16 %v1189
      %v1203 = vunpack.c.l.b16 %v1190
      %v1204 = vpack.c.b16 %v1201, %v1200
      %v1205 = vpack.c.b16 %v1203, %v1202
      %v1209 = vsel %vm171, %v1195, 0
      %1211 = vmatprep.subr.bf16.mxu0 0
      %1212 = vmatpush1.bf16.msra.mxu0 %v1204
      %1213 = vmatprep.subr.bf16.mxu0 0
      %1214 = vmatpush1.bf16.msra.mxu0 %v1205
      %1215 = vmatprep.subr.bf16.mxu0 0
      %1216 = vmatpush1.bf16.msra.mxu0 0
      %1217 = vmatprep.subr.bf16.mxu0 0
      %1218 = vmatpush1.bf16.msra.mxu0 0
      %1219 = vmatprep.subr.bf16.mxu0 0
      %1220 = vmatpush1.bf16.msra.mxu0 0
      %1221 = vmatprep.subr.bf16.mxu0 0
      %1222 = vmatpush1.bf16.msra.mxu0 0
      %1223 = vmatprep.subr.bf16.mxu0 0
      %1224 = vmatpush1.bf16.msra.mxu0 0
      %1225 = vmatprep.subr.bf16.mxu0 0
      %1226 = vmatpush1.bf16.msra.mxu0 0
      %1227 = vmatprep.subr.bf16.mxu0 0
      %1228 = vmatpush1.bf16.msra.mxu0 0
      %1229 = vmatprep.subr.bf16.mxu0 0
      %1230 = vmatpush1.bf16.msra.mxu0 0
      %1231 = vmatprep.subr.bf16.mxu0 0
      %1232 = vmatpush1.bf16.msra.mxu0 0
      %1233 = vmatprep.subr.bf16.mxu0 0
      %1234 = vmatpush1.bf16.msra.mxu0 0
      %1235 = vmatprep.subr.bf16.mxu0 0
      %1236 = vmatpush1.bf16.msra.mxu0 0
      %1237 = vmatprep.subr.bf16.mxu0 0
      %1238 = vmatpush1.bf16.msra.mxu0 0
      %1239 = vmatprep.subr.bf16.mxu0 0
      %1240 = vmatpush1.bf16.msra.mxu0 0
      %1241 = vmatprep.subr.bf16.mxu0 0
      %1242 = vmatpush1.bf16.msra.mxu0 0
      %1243 = vmatprep.mubr.bf16.mxu0 0
      %1244 = vmatmul.mubr.bf16.gmra.mrb[0].mxu0 %v1209
      %v1245 = vpop.f32.mrb[0].mxu0
      %v1246 = vadd.f32 0.0, %v1245
      %v1247 = vpop.f32.mrb[0].mxu0
      %v1248 = vpop.f32.mrb[0].mxu0
      %v1249 = vadd.f32 0.0, %v1248
      %v1250 = vpop.f32.mrb[0].mxu0
      %1251 = vdwg.mxu0
      %v1256 = vunpack.c.l.b16 %v1181
      %v1257 = vunpack.c.l.b16 %v1182
      %v1258 = vunpack.c.l.b16 %v1183
      %v1259 = vunpack.c.l.b16 %v1184
      %v1260 = vpack.c.b16 %v1257, %v1256
      %v1261 = vpack.c.b16 %v1259, %v1258
      %v1265 = vsel %vm171, %v1180, 0
      %1267 = vmatprep.subr.bf16.mxu0 0
      %1268 = vmatpush1.bf16.msra.mxu0 %v1260
      %1269 = vmatprep.subr.bf16.mxu0 0
      %1270 = vmatpush1.bf16.msra.mxu0 %v1261
      %1271 = vmatprep.subr.bf16.mxu0 0
      %1272 = vmatpush1.bf16.msra.mxu0 0
      %1273 = vmatprep.subr.bf16.mxu0 0
      %1274 = vmatpush1.bf16.msra.mxu0 0
      %1275 = vmatprep.subr.bf16.mxu0 0
      %1276 = vmatpush1.bf16.msra.mxu0 0
      %1277 = vmatprep.subr.bf16.mxu0 0
      %1278 = vmatpush1.bf16.msra.mxu0 0
      %1279 = vmatprep.subr.bf16.mxu0 0
      %1280 = vmatpush1.bf16.msra.mxu0 0
      %1281 = vmatprep.subr.bf16.mxu0 0
      %1282 = vmatpush1.bf16.msra.mxu0 0
      %1283 = vmatprep.subr.bf16.mxu0 0
      %1284 = vmatpush1.bf16.msra.mxu0 0
      %1285 = vmatprep.subr.bf16.mxu0 0
      %1286 = vmatpush1.bf16.msra.mxu0 0
      %1287 = vmatprep.subr.bf16.mxu0 0
      %1288 = vmatpush1.bf16.msra.mxu0 0
      %1289 = vmatprep.subr.bf16.mxu0 0
      %1290 = vmatpush1.bf16.msra.mxu0 0
      %1291 = vmatprep.subr.bf16.mxu0 0
      %1292 = vmatpush1.bf16.msra.mxu0 0
      %1293 = vmatprep.subr.bf16.mxu0 0
      %1294 = vmatpush1.bf16.msra.mxu0 0
      %1295 = vmatprep.subr.bf16.mxu0 0
      %1296 = vmatpush1.bf16.msra.mxu0 0
      %1297 = vmatprep.subr.bf16.mxu0 0
      %1298 = vmatpush1.bf16.msra.mxu0 0
      %1299 = vmatprep.mubr.bf16.mxu0 0
      %1300 = vmatmul.mubr.bf16.gmra.mrb[0].mxu0 %v1265
      %v1301 = vpop.f32.mrb[0].mxu0
      %v1302 = vadd.f32 %v1246, %v1301
      %v1303 = vpop.f32.mrb[0].mxu0
      %v1304 = vpop.f32.mrb[0].mxu0
      %v1305 = vadd.f32 %v1249, %v1304
      %v1306 = vpop.f32.mrb[0].mxu0
      %1307 = vdwg.mxu0
      %v1308 = vld [vmem:[%s16] sm:$0x1]
      %v1310 = vlaneseq
      %v1311 = vshrl.u32 %v1310, 7
      %v1312 = vsub.s32 0, %v1311
      %v1313 = vrot.slane %v1308, %v1312
      %v1315 = vadd.f32 %v1302, %v1313
      %v1316 = vadd.f32 %v1305, %v1313
      %v1317 = vmax.f32 %v1315, 0.0
      %v1318 = vmax.f32 %v1316, 0.0
      %v1319 = vpack.c.bf16 %v1318, %v1317
      %v1320 = vld [vmem:[%s17] sm:$0xf]
      %v1321 = vld [vmem:[%s17 + $0x4] sm:$0xf]
      %v1322 = vld [vmem:[%s17 + $0x8] sm:$0xf]
      %v1323 = vld [vmem:[%s17 + $0xc] sm:$0xf]
      %v1324 = vld [vmem:[%s17 + $0x10] sm:$0xf]
      %v1325 = vld [vmem:[%s17 + $0x14] sm:$0xf]
      %v1326 = vld [vmem:[%s17 + $0x18] sm:$0xf]
      %v1327 = vld [vmem:[%s17 + $0x1c] sm:$0xf]
      %v1328 = vld [vmem:[%s17 + $0x20] sm:$0xf]
      %v1329 = vld [vmem:[%s17 + $0x24] sm:$0xf]
      %v1330 = vld [vmem:[%s17 + $0x28] sm:$0xf]
      %v1331 = vld [vmem:[%s17 + $0x2c] sm:$0xf]
      %v1332 = vld [vmem:[%s17 + $0x30] sm:$0xf]
      %v1333 = vld [vmem:[%s17 + $0x34] sm:$0xf]
      %v1334 = vld [vmem:[%s17 + $0x38] sm:$0xf]
      %v1335 = vld [vmem:[%s17 + $0x3c] sm:$0xf]
      %v1336 = vld [vmem:[%s18] sm:$0x1]
      %v1338 = vlaneseq
      %v1339 = vshrl.u32 %v1338, 7
      %v1340 = vsub.s32 0, %v1339
      %v1341 = vrot.slane %v1336, %v1340
      %v1359 = vunpack.c.l.b16 %v1320
      %v1360 = vunpack.c.l.b16 %v1321
      %v1361 = vunpack.c.l.b16 %v1322
      %v1362 = vunpack.c.l.b16 %v1323
      %v1363 = vunpack.c.l.b16 %v1324
      %v1364 = vunpack.c.l.b16 %v1325
      %v1365 = vunpack.c.l.b16 %v1326
      %v1366 = vunpack.c.l.b16 %v1327
      %v1367 = vunpack.c.l.b16 %v1328
      %v1368 = vunpack.c.l.b16 %v1329
      %v1369 = vunpack.c.l.b16 %v1330
      %v1370 = vunpack.c.l.b16 %v1331
      %v1371 = vunpack.c.l.b16 %v1332
      %v1372 = vunpack.c.l.b16 %v1333
      %v1373 = vunpack.c.l.b16 %v1334
      %v1374 = vunpack.c.l.b16 %v1335
      %v1375 = vpack.c.b16 %v1360, %v1359
      %v1376 = vpack.c.b16 %v1362, %v1361
      %v1377 = vpack.c.b16 %v1364, %v1363
      %v1378 = vpack.c.b16 %v1366, %v1365
      %v1379 = vpack.c.b16 %v1368, %v1367
      %v1380 = vpack.c.b16 %v1370, %v1369
      %v1381 = vpack.c.b16 %v1372, %v1371
      %v1382 = vpack.c.b16 %v1374, %v1373
      %1391 = vmatprep.subr.bf16.mxu0 0
      %1392 = vmatpush1.bf16.msra.mxu0 %v1375
      %1393 = vmatprep.subr.bf16.mxu0 0
      %1394 = vmatpush1.bf16.msra.mxu0 %v1376
      %1395 = vmatprep.subr.bf16.mxu0 0
      %1396 = vmatpush1.bf16.msra.mxu0 %v1377
      %1397 = vmatprep.subr.bf16.mxu0 0
      %1398 = vmatpush1.bf16.msra.mxu0 %v1378
      %1399 = vmatprep.subr.bf16.mxu0 0
      %1400 = vmatpush1.bf16.msra.mxu0 %v1379
      %1401 = vmatprep.subr.bf16.mxu0 0
      %1402 = vmatpush1.bf16.msra.mxu0 %v1380
      %1403 = vmatprep.subr.bf16.mxu0 0
      %1404 = vmatpush1.bf16.msra.mxu0 %v1381
      %1405 = vmatprep.subr.bf16.mxu0 0
      %1406 = vmatpush1.bf16.msra.mxu0 %v1382
      %1407 = vmatprep.subr.bf16.mxu0 0
      %1408 = vmatpush1.bf16.msra.mxu0 0
      %1409 = vmatprep.subr.bf16.mxu0 0
      %1410 = vmatpush1.bf16.msra.mxu0 0
      %1411 = vmatprep.subr.bf16.mxu0 0
      %1412 = vmatpush1.bf16.msra.mxu0 0
      %1413 = vmatprep.subr.bf16.mxu0 0
      %1414 = vmatpush1.bf16.msra.mxu0 0
      %1415 = vmatprep.subr.bf16.mxu0 0
      %1416 = vmatpush1.bf16.msra.mxu0 0
      %1417 = vmatprep.subr.bf16.mxu0 0
      %1418 = vmatpush1.bf16.msra.mxu0 0
      %1419 = vmatprep.subr.bf16.mxu0 0
      %1420 = vmatpush1.bf16.msra.mxu0 0
      %1421 = vmatprep.subr.bf16.mxu0 0
      %1422 = vmatpush1.bf16.msra.mxu0 0
      %1423 = vmatprep.mubr.bf16.mxu0 0
      %1424 = vmatmul.mubr.bf16.gmra.mrb[0].mxu0 %v1319
      %v1425 = vpop.f32.mrb[0].mxu0
      %v1426 = vadd.f32 %v1341, %v1425
      %v1427 = vpop.f32.mrb[0].mxu0
      %v1428 = vpop.f32.mrb[0].mxu0
      %v1429 = vadd.f32 %v1341, %v1428
      %v1430 = vpop.f32.mrb[0].mxu0
      %1431 = vdwg.mxu0
      %v1432 = vmax.f32 %v1426, 0.0
      %v1433 = vmax.f32 %v1429, 0.0
      %v1434 = vpack.c.bf16 %v1433, %v1432
      %v1435 = vld [vmem:[%s19] sm:$0xf]
      %v1436 = vld [vmem:[%s19 + $0x4] sm:$0xf]
      %v1437 = vld [vmem:[%s19 + $0x8] sm:$0xf]
      %v1438 = vld [vmem:[%s19 + $0xc] sm:$0xf]
      %v1439 = vld [vmem:[%s19 + $0x10] sm:$0xf]
      %v1440 = vld [vmem:[%s19 + $0x14] sm:$0xf]
      %v1441 = vld [vmem:[%s19 + $0x18] sm:$0xf]
      %v1442 = vld [vmem:[%s19 + $0x1c] sm:$0xf]
      %v1443 = vld [vmem:[%s20] sm:$0x1]
      %v1445 = vlaneseq
      %v1446 = vshrl.u32 %v1445, 7
      %v1447 = vsub.s32 0, %v1446
      %v1448 = vrot.slane %v1443, %v1447
      %v1458 = vunpack.c.l.b16 %v1435
      %v1459 = vunpack.c.l.b16 %v1436
      %v1460 = vunpack.c.l.b16 %v1437
      %v1461 = vunpack.c.l.b16 %v1438
      %v1462 = vunpack.c.l.b16 %v1439
      %v1463 = vunpack.c.l.b16 %v1440
      %v1464 = vunpack.c.l.b16 %v1441
      %v1465 = vunpack.c.l.b16 %v1442
      %v1466 = vpack.c.b16 %v1459, %v1458
      %v1467 = vpack.c.b16 %v1461, %v1460
      %v1468 = vpack.c.b16 %v1463, %v1462
      %v1469 = vpack.c.b16 %v1465, %v1464
      %v1475 = vsel %vm953, %v1434, 0
      %1477 = vmatprep.subr.bf16.mxu0 0
      %1478 = vmatpush1.bf16.msra.mxu0 %v1466
      %1479 = vmatprep.subr.bf16.mxu0 0
      %1480 = vmatpush1.bf16.msra.mxu0 %v1467
      %1481 = vmatprep.subr.bf16.mxu0 0
      %1482 = vmatpush1.bf16.msra.mxu0 %v1468
      %1483 = vmatprep.subr.bf16.mxu0 0
      %1484 = vmatpush1.bf16.msra.mxu0 %v1469
      %1485 = vmatprep.subr.bf16.mxu0 0
      %1486 = vmatpush1.bf16.msra.mxu0 0
      %1487 = vmatprep.subr.bf16.mxu0 0
      %1488 = vmatpush1.bf16.msra.mxu0 0
      %1489 = vmatprep.subr.bf16.mxu0 0
      %1490 = vmatpush1.bf16.msra.mxu0 0
      %1491 = vmatprep.subr.bf16.mxu0 0
      %1492 = vmatpush1.bf16.msra.mxu0 0
      %1493 = vmatprep.subr.bf16.mxu0 0
      %1494 = vmatpush1.bf16.msra.mxu0 0
      %1495 = vmatprep.subr.bf16.mxu0 0
      %1496 = vmatpush1.bf16.msra.mxu0 0
      %1497 = vmatprep.subr.bf16.mxu0 0
      %1498 = vmatpush1.bf16.msra.mxu0 0
      %1499 = vmatprep.subr.bf16.mxu0 0
      %1500 = vmatpush1.bf16.msra.mxu0 0
      %1501 = vmatprep.subr.bf16.mxu0 0
      %1502 = vmatpush1.bf16.msra.mxu0 0
      %1503 = vmatprep.subr.bf16.mxu0 0
      %1504 = vmatpush1.bf16.msra.mxu0 0
      %1505 = vmatprep.subr.bf16.mxu0 0
      %1506 = vmatpush1.bf16.msra.mxu0 0
      %1507 = vmatprep.subr.bf16.mxu0 0
      %1508 = vmatpush1.bf16.msra.mxu0 0
      %1509 = vmatprep.mubr.bf16.mxu0 0
      %1510 = vmatmul.mubr.bf16.gmra.mrb[0].mxu0 %v1475
      %v1511 = vpop.f32.mrb[0].mxu0
      %v1512 = vadd.f32 %v1448, %v1511
      %v1513 = vpop.f32.mrb[0].mxu0
      %v1514 = vpop.f32.mrb[0].mxu0
      %v1515 = vadd.f32 %v1448, %v1514
      %v1516 = vpop.f32.mrb[0].mxu0
      %1517 = vdwg.mxu0
      %1518 = vst.msk [vmem:[#allocation3] sm:$0xff] %vm171, %v1512
      %1519 = vst.msk [vmem:[#allocation3 + $0x8] sm:$0xff] %vm171, %v1515
    $region93: #{megnet_layer.1} parent=1 // pred_fallthru
      _
    // Predicated region
    $region94: #{megnet_layer.1} parent=1 // pred_check
      _
    $region95: #{megnet_layer.1} parent=1 // pred_check_branch
      %1521 = sbr.rel (0) target = $region97
    $region96: #{megnet_layer.1} parent=1 // pred_region
      %s1523 = ssub.s32 256, 256
      %1524 = vsyncadd [#allocation4], %s1523
      %s1525 = sshll.u32 [#allocation3], 4
      %s1526 = int_to_ptr.vmem [resolvable:$true] %s1525
      %1531 = dma.vmem_to_hbm [thread:$0]  %s1526, 256, %s21, [#allocation4], 128, 128, 8
    $region97: #{megnet_layer.1} parent=1 // pred_fallthru
      _
    // Predicated region
    $region98: #{megnet_layer.1} parent=1 // pred_check
      _
    $region99: #{megnet_layer.1} parent=1 // pred_check_branch
      %1533 = sbr.rel (0) target = $region101
    $region100: #{megnet_layer.1} parent=1 // pred_region
      _
    $region101: #{megnet_layer.1} parent=1 // pred_fallthru
      _
    // Predicated region
    $region102: #{megnet_layer.1} parent=1 // pred_check
      _
    $region103: #{megnet_layer.1} parent=1 // pred_check_branch
      %1535 = sbr.rel (0) target = $region105
    $region104: #{megnet_layer.1} parent=1 // pred_region
      %1536 = dma.done [#allocation4], 256
    $region105: #{megnet_layer.1} parent=1 // pred_fallthru
      _
    // Predicated region
    $region106: #{megnet_layer.1} parent=1 // pred_check
      _
    $region107: #{megnet_layer.1} parent=1 // pred_check_branch
      %1538 = sbr.rel (0) target = $region109
    $region108: #{megnet_layer.1} parent=1 // pred_region
      _
    $region109: #{megnet_layer.1} parent=1 // pred_fallthru
      _
    %1539 = vsyncpa [#allocation4], 1

</llo_original>
